<compile_context>
chip_gen: v5e
topology: v5e:2x2
jax: 0.10.0
libtpu: 0.0.40
codegen_flags: <defaults>
</compile_context>

<pallas_src>
import jax
import jax.numpy as jnp
from jax.experimental import pallas as pl
from jax.experimental.pallas import tpu as pltpu


# ----------------------------------------------------------------------------
# Pallas kernel 1: conv-as-GEMM   out = relu( patches @ w_fold + b_fold )
#   (eval-mode BatchNorm folded into w_fold / b_fold at prep time)
# ----------------------------------------------------------------------------
def _conv_gemm_kernel(p_ref, w_ref, b_ref, o_ref):
    y = jnp.dot(p_ref[...], w_ref[...], preferred_element_type=jnp.float32)
    y = jnp.maximum(y + b_ref[...], 0.0)
    o_ref[...] = y.astype(o_ref.dtype)


def _pick_m_tile(M, max_blocks=8):
    """Largest equal split of M whose tile is a multiple of 8 (>= 2 blocks
    when possible, so both v7x TensorCores get work). Falls back to a single
    full-extent block, which is always a legal block shape."""
    if M % 8 == 0:
        for nb in range(2, max_blocks + 1):
            if M % nb == 0 and (M // nb) % 8 == 0:
                return M // nb
    return M


def conv_gemm_bias_relu(patches, w_fold, b_fold, out_dtype=jnp.bfloat16):
    """patches: [M, K] bf16; w_fold: [K, Cout] bf16; b_fold: [1, Cout] f32.

    Returns exactly [M, Cout] in out_dtype (no padding, no slicing)."""
    M, K = patches.shape
    Cout = w_fold.shape[1]
    tm = _pick_m_tile(M)
    grid = (M // tm,)
    return pl.pallas_call(
        _conv_gemm_kernel,
        out_shape=jax.ShapeDtypeStruct((M, Cout), out_dtype),
        grid=grid,
        in_specs=[
            pl.BlockSpec((tm, K), lambda i: (i, 0)),     # K = full minor dim
            pl.BlockSpec((K, Cout), lambda i: (0, 0)),   # weight resident
            pl.BlockSpec((1, Cout), lambda i: (0, 0)),   # folded bias resident
        ],
        out_specs=pl.BlockSpec((tm, Cout), lambda i: (i, 0)),
        compiler_params=pltpu.CompilerParams(
            dimension_semantics=("parallel",),
        ),
    )(patches, w_fold, b_fold)


# ----------------------------------------------------------------------------
# Pallas kernel 2: fused branch-FCs + concat + fusion head (single call)
#   v = relu(xv @ Wv + bv);  t = relu(xt @ Wt + bt)
#   h = relu(v @ W1v + t @ W1t + b1)      # == relu(concat(v,t) @ W1 + b1)
#   o = h @ W2 + b2                       # F.dropout is identity in eval mode
# ----------------------------------------------------------------------------
def _fused_fc_head_kernel(xv_ref, xt_ref, wv_ref, bv_ref, wt_ref, bt_ref,
                          w1v_ref, w1t_ref, b1_ref, w2_ref, b2_ref, o_ref):
    v = jnp.dot(xv_ref[...], wv_ref[...], preferred_element_type=jnp.float32)
    v = jnp.maximum(v + bv_ref[...], 0.0)
    t = jnp.dot(xt_ref[...], wt_ref[...], preferred_element_type=jnp.float32)
    t = jnp.maximum(t + bt_ref[...], 0.0)

    h = jnp.dot(v.astype(w1v_ref.dtype), w1v_ref[...],
                preferred_element_type=jnp.float32)
    h = h + jnp.dot(t.astype(w1t_ref.dtype), w1t_ref[...],
                    preferred_element_type=jnp.float32)
    h = jnp.maximum(h + b1_ref[...], 0.0)

    y = jnp.dot(h.astype(w2_ref.dtype), w2_ref[...],
                preferred_element_type=jnp.float32)
    o_ref[...] = y + b2_ref[...]


def fused_fc_head(xv, xt, prep):
    """xv: [N, Kv] bf16, xt: [N, Kt] bf16 (channels-last flattened conv outs)."""
    N = xv.shape[0]
    args = (xv, xt,
            prep['v_fc_w'], prep['v_fc_b'],
            prep['t_fc_w'], prep['t_fc_b'],
            prep['h_w1v'], prep['h_w1t'], prep['h_b1'],
            prep['h_w2'], prep['h_b2'])
    num_classes = prep['h_w2'].shape[1]
    in_specs = [pl.BlockSpec(a.shape, lambda i: (0, 0)) for a in args]
    return pl.pallas_call(
        _fused_fc_head_kernel,
        out_shape=jax.ShapeDtypeStruct((N, num_classes), jnp.float32),
        grid=(1,),
        in_specs=in_specs,
        out_specs=pl.BlockSpec((N, num_classes), lambda i: (0, 0)),
        compiler_params=pltpu.CompilerParams(
            dimension_semantics=("arbitrary",),
        ),
    )(*args)


# ----------------------------------------------------------------------------
# Layer glue (channels-last activations [N, D, H, W, C], all bf16)
# ----------------------------------------------------------------------------
def conv3d_bn_relu(x, w_fold, b_fold, k=3):
    """Conv3d(k=3, s=1, p=0) + folded eval-mode BN + ReLU.

    x: [N, D, H, W, Cin] bf16 channels-last. Patch matrix is built in bf16
    directly in the (kd, kh, kw, ci) order matching w_fold's rows.
    """
    N, D, H, W, Cin = x.shape
    Do, Ho, Wo = D - k + 1, H - k + 1, W - k + 1
    cols = []
    for kd in range(k):
        for kh in range(k):
            for kw in range(k):
                cols.append(x[:, kd:kd + Do, kh:kh + Ho, kw:kw + Wo, :])
    patches = jnp.concatenate(cols, axis=-1)                  # [N,Do,Ho,Wo,27*Cin]
    patches = patches.reshape(N * Do * Ho * Wo, k ** 3 * Cin)
    y = conv_gemm_bias_relu(patches, w_fold, b_fold)          # [M, Cout] bf16
    return y.reshape(N, Do, Ho, Wo, -1)


# ----------------------------------------------------------------------------
# One-time parameter preparation (hoisted out of the forward pass)
# ----------------------------------------------------------------------------
def _fold_bn_into_conv(w, b, bn, eps=1e-5):
    """w: [Cout, Cin, k, k, k] (PyTorch), b: [Cout]. Returns ([K, Cout] bf16,
    [1, Cout] f32) with eval-mode BatchNorm folded in; row order (kd,kh,kw,ci)."""
    Cout, Cin, k, _, _ = w.shape
    scale = bn['g'] / jnp.sqrt(bn['v'] + eps)
    w_t = jnp.transpose(w, (2, 3, 4, 1, 0)).reshape(k ** 3 * Cin, Cout)
    w_fold = (w_t * scale[None, :]).astype(jnp.bfloat16)
    b_fold = (b * scale + (bn['b'] - bn['m'] * scale)).reshape(1, Cout)
    return w_fold, b_fold.astype(jnp.float32)


def _fc_weight_channels_last(w, dhwc):
    """w: [Kout, C*D*H*W] (PyTorch C-major flatten). Permute columns to the
    channels-last (D,H,W,C) flatten order and transpose -> [D*H*W*C, Kout]."""
    D, H, W, C = dhwc
    Kout = w.shape[0]
    w_r = (w.reshape(Kout, C, D, H, W)
            .transpose(0, 2, 3, 4, 1)
            .reshape(Kout, -1).T)
    return w_r.astype(jnp.bfloat16)


def prepare_inference_params(params, cfg):
    p = params
    v1 = (cfg['v_dim'] - 2, cfg['img_xv'] - 2, cfg['img_yv'] - 2)
    v2 = tuple(s - 2 for s in v1)
    t1 = (cfg['t_dim'] - 2, cfg['img_xt'] - 2, cfg['img_yt'] - 2)

    v_w1, v_b1 = _fold_bn_into_conv(p['v_conv1_w'], p['v_conv1_b'], p['v_bn1'])
    v_w2, v_b2 = _fold_bn_into_conv(p['v_conv2_w'], p['v_conv2_b'], p['v_bn2'])
    t_w1, t_b1 = _fold_bn_into_conv(p['t_conv1_w'], p['t_conv1_b'], p['t_bn1'])

    hv = cfg['fc_hidden_v']
    # Head fc1 weight split so concat(v, t) @ W1.T == v @ W1v + t @ W1t.
    w1_t = p['fc1_w'].T                                   # [hv+ht, fc_hidden_1]
    return {
        'v_w1': v_w1, 'v_b1': v_b1,
        'v_w2': v_w2, 'v_b2': v_b2,
        't_w1': t_w1, 't_b1': t_b1,
        'v_fc_w': _fc_weight_channels_last(p['v_fc1_w'], (*v2, cfg['ch2_v'])),
        'v_fc_b': p['v_fc1_b'].reshape(1, -1).astype(jnp.float32),
        't_fc_w': _fc_weight_channels_last(p['t_fc1_w'], (*t1, cfg['ch1_t'])),
        't_fc_b': p['t_fc1_b'].reshape(1, -1).astype(jnp.float32),
        'h_w1v': w1_t[:hv, :].astype(jnp.bfloat16),
        'h_w1t': w1_t[hv:, :].astype(jnp.bfloat16),
        'h_b1': p['fc1_b'].reshape(1, -1).astype(jnp.float32),
        'h_w2': p['fc2_w'].T.astype(jnp.bfloat16),
        'h_b2': p['fc2_b'].reshape(1, -1).astype(jnp.float32),
    }


# ----------------------------------------------------------------------------
# Parameters (deterministic synthetic init, PyTorch shapes)
# ----------------------------------------------------------------------------
def _conv_out(sz):
    return tuple(s - 2 for s in sz)   # k=3, s=1, p=0


def init_c3d_params(key, *, v_dim, img_xv, img_yv, fc_hidden_v, ch1_v, ch2_v,
                    t_dim, img_xt, img_yt, fc_hidden_t, ch1_t,
                    fc_hidden_1, num_classes):
    keys = jax.random.split(key, 12)
    nrm = lambda k, shp: (0.05 * jax.random.normal(k, shp)).astype(jnp.float32)

    v_c1 = _conv_out((v_dim, img_xv, img_yv))
    v_c2 = _conv_out(v_c1)
    t_c1 = _conv_out((t_dim, img_xt, img_yt))
    fc_dim_v = ch2_v * v_c2[0] * v_c2[1] * v_c2[2]
    fc_dim_t = ch1_t * t_c1[0] * t_c1[1] * t_c1[2]

    def bn(ch):
        return dict(g=jnp.ones((ch,), jnp.float32), b=jnp.zeros((ch,), jnp.float32),
                    m=jnp.zeros((ch,), jnp.float32), v=jnp.ones((ch,), jnp.float32))

    return {
        # visual CNN3D
        'v_conv1_w': nrm(keys[0], (ch1_v, 3, 3, 3, 3)),
        'v_conv1_b': nrm(keys[1], (ch1_v,)),
        'v_bn1': bn(ch1_v),
        'v_conv2_w': nrm(keys[2], (ch2_v, ch1_v, 3, 3, 3)),
        'v_conv2_b': nrm(keys[3], (ch2_v,)),
        'v_bn2': bn(ch2_v),
        'v_fc1_w': nrm(keys[4], (fc_hidden_v, fc_dim_v)),
        'v_fc1_b': nrm(keys[5], (fc_hidden_v,)),
        # tactile CNN3D1
        't_conv1_w': nrm(keys[6], (ch1_t, 3, 3, 3, 3)),
        't_conv1_b': nrm(keys[7], (ch1_t,)),
        't_bn1': bn(ch1_t),
        't_fc1_w': nrm(keys[8], (fc_hidden_t, fc_dim_t)),
        't_fc1_b': nrm(keys[9], (fc_hidden_t,)),
        # fusion head
        'fc1_w': nrm(keys[10], (fc_hidden_1, fc_hidden_v + fc_hidden_t)),
        'fc1_b': jnp.zeros((fc_hidden_1,), jnp.float32),
        'fc2_w': nrm(keys[11], (num_classes, fc_hidden_1)),
        'fc2_b': jnp.zeros((num_classes,), jnp.float32),
    }


# ----------------------------------------------------------------------------
# Full C3D forward (eval mode) — 4 pallas_calls total
# ----------------------------------------------------------------------------
def c3d_forward(prep, x_v, x_t):
    # Convert NCDHW inputs once to channels-last NDHWC bf16 (cast before any
    # patch slicing so the expanded im2col traffic is already half-width).
    xv = jnp.transpose(x_v, (0, 2, 3, 4, 1)).astype(jnp.bfloat16)
    xt = jnp.transpose(x_t, (0, 2, 3, 4, 1)).astype(jnp.bfloat16)
    N = x_v.shape[0]

    # ---- visual branch (CNN3D); Dropout3d is identity in eval mode ----
    v = conv3d_bn_relu(xv, prep['v_w1'], prep['v_b1'])
    v = conv3d_bn_relu(v, prep['v_w2'], prep['v_b2'])

    # ---- tactile branch (CNN3D1) ----
    t = conv3d_bn_relu(xt, prep['t_w1'], prep['t_b1'])

    # ---- branch FCs + concat + fusion head fused into one kernel ----
    return fused_fc_head(v.reshape(N, -1), t.reshape(N, -1), prep)


if __name__ == "__main__":
    # Small-but-consistent shapes (C3D with reduced hyperparameters).
    B = 2
    cfg = dict(v_dim=5, img_xv=16, img_yv=16, fc_hidden_v=32, ch1_v=4, ch2_v=6,
               t_dim=8, img_xt=4, img_yt=4, fc_hidden_t=16, ch1_t=4,
               fc_hidden_1=32, num_classes=3)

    key = jax.random.PRNGKey(0)
    k_params, k_xv, k_xt = jax.random.split(key, 3)
    params = init_c3d_params(k_params, **cfg)

    # One-time weight prep (BN fold, transposes, permutations, bf16 casts) —
    # hoisted out of the per-call forward.
    prep = prepare_inference_params(params, cfg)
    prep = jax.tree_util.tree_map(jax.block_until_ready, prep)

    x_v = jax.random.normal(k_xv, (B, 3, cfg['v_dim'], cfg['img_xv'], cfg['img_yv']),
                            dtype=jnp.float32)   # visual NCDHW
    x_t = jax.random.normal(k_xt, (B, 3, cfg['t_dim'], cfg['img_xt'], cfg['img_yt']),
                            dtype=jnp.float32)   # tactile NCDHW

    fwd = jax.jit(c3d_forward)
    out = fwd(prep, x_v, x_t)
    out = jax.block_until_ready(out)
    assert out.shape == (B, cfg['num_classes'])
    print("KERNEL_OK")
</pallas_src>

<mosaic_0001>
module attributes {stable_mosaic.version = 11 : i64} {
  func.func @_conv_gemm_kernel(%arg0: i32, %arg1: memref<392x81xbf16, #tpu.memory_space<vmem>>, %arg2: memref<81x4xbf16, #tpu.memory_space<vmem>>, %arg3: memref<1x4xf32, #tpu.memory_space<vmem>>, %arg4: memref<392x4xbf16, #tpu.memory_space<vmem>>) attributes {dimension_semantics = [#tpu.dimension_semantics<parallel>], iteration_bounds = array<i64: 3>, scalar_prefetch = 0 : i64, scratch_operands = 0 : i64, tpu.core_type = #tpu.core_type<tc>, window_params = [{transform_indices = @transform_0, window_bounds = array<i64: 392, 81>}, {pipeline_mode = #tpu.pipeline_mode<synchronous>, transform_indices = @transform_1, window_bounds = array<i64: 81, 4>}, {pipeline_mode = #tpu.pipeline_mode<synchronous>, transform_indices = @transform_2, window_bounds = array<i64: 1, 4>}, {transform_indices = @transform_3, window_bounds = array<i64: 392, 4>}]} {
    %c0 = arith.constant 0 : index
    %c0_0 = arith.constant 0 : index
    %0 = vector.load %arg1[%c0, %c0_0] : memref<392x81xbf16, #tpu.memory_space<vmem>>, vector<392x81xbf16>
    %c0_1 = arith.constant 0 : index
    %c0_2 = arith.constant 0 : index
    %1 = vector.load %arg2[%c0_1, %c0_2] : memref<81x4xbf16, #tpu.memory_space<vmem>>, vector<81x4xbf16>
    %cst = arith.constant dense<0.000000e+00> : vector<392x4xf32>
    %2 = tpu.matmul %0, %1, %cst {dimension_numbers = #tpu.dot_dimension_numbers<[1], [0], [0], [1], [0, 0, 1, 1], [], []>} : vector<392x81xbf16>, vector<81x4xbf16>, vector<392x4xf32> -> vector<392x4xf32>
    %c0_3 = arith.constant 0 : index
    %c0_4 = arith.constant 0 : index
    %3 = vector.load %arg3[%c0_3, %c0_4] : memref<1x4xf32, #tpu.memory_space<vmem>>, vector<1x4xf32>
    %4 = vector.broadcast %3 : vector<1x4xf32> to vector<392x4xf32>
    %5 = arith.addf %2, %4 : vector<392x4xf32>
    %cst_5 = arith.constant 0.000000e+00 : f32
    %6 = vector.broadcast %cst_5 : f32 to vector<392x4xf32>
    %7 = arith.maximumf %5, %6 : vector<392x4xf32>
    %8 = arith.truncf %7 : vector<392x4xf32> to vector<392x4xbf16>
    %c0_6 = arith.constant 0 : index
    %c0_7 = arith.constant 0 : index
    %9 = vector.load %arg4[%c0_6, %c0_7] : memref<392x4xbf16, #tpu.memory_space<vmem>>, vector<392x4xbf16>
    tpu.vector_store %arg4[%c0_6, %c0_7], %8 {strides = array<i32>} : memref<392x4xbf16, #tpu.memory_space<vmem>>, vector<392x4xbf16>,
    return
  }
  func.func @transform_0(%arg0: i32) -> (i32, i32) {
    %c0_i32 = arith.constant 0 : i32
    %c0_i32_0 = arith.constant 0 : i32
    return %arg0, %c0_i32 : i32, i32
  }
  func.func @transform_1(%arg0: i32) -> (i32, i32) {
    %c0_i32 = arith.constant 0 : i32
    %c0_i32_0 = arith.constant 0 : i32
    %c0_i32_1 = arith.constant 0 : i32
    return %c0_i32, %c0_i32_0 : i32, i32
  }
  func.func @transform_2(%arg0: i32) -> (i32, i32) {
    %c0_i32 = arith.constant 0 : i32
    %c0_i32_0 = arith.constant 0 : i32
    %c0_i32_1 = arith.constant 0 : i32
    return %c0_i32, %c0_i32_0 : i32, i32
  }
  func.func @transform_3(%arg0: i32) -> (i32, i32) {
    %c0_i32 = arith.constant 0 : i32
    %c0_i32_0 = arith.constant 0 : i32
    return %arg0, %c0_i32 : i32, i32
  }
}

module attributes {stable_mosaic.version = 11 : i64} {
  func.func @_conv_gemm_kernel(%arg0: i32, %arg1: memref<144x108xbf16, #tpu.memory_space<vmem>>, %arg2: memref<108x6xbf16, #tpu.memory_space<vmem>>, %arg3: memref<1x6xf32, #tpu.memory_space<vmem>>, %arg4: memref<144x6xbf16, #tpu.memory_space<vmem>>) attributes {dimension_semantics = [#tpu.dimension_semantics<parallel>], iteration_bounds = array<i64: 2>, scalar_prefetch = 0 : i64, scratch_operands = 0 : i64, tpu.core_type = #tpu.core_type<tc>, window_params = [{transform_indices = @transform_0, window_bounds = array<i64: 144, 108>}, {pipeline_mode = #tpu.pipeline_mode<synchronous>, transform_indices = @transform_1, window_bounds = array<i64: 108, 6>}, {pipeline_mode = #tpu.pipeline_mode<synchronous>, transform_indices = @transform_2, window_bounds = array<i64: 1, 6>}, {transform_indices = @transform_3, window_bounds = array<i64: 144, 6>}]} {
    %c0 = arith.constant 0 : index
    %c0_0 = arith.constant 0 : index
    %0 = vector.load %arg1[%c0, %c0_0] : memref<144x108xbf16, #tpu.memory_space<vmem>>, vector<144x108xbf16>
    %c0_1 = arith.constant 0 : index
    %c0_2 = arith.constant 0 : index
    %1 = vector.load %arg2[%c0_1, %c0_2] : memref<108x6xbf16, #tpu.memory_space<vmem>>, vector<108x6xbf16>
    %cst = arith.constant dense<0.000000e+00> : vector<144x6xf32>
    %2 = tpu.matmul %0, %1, %cst {dimension_numbers = #tpu.dot_dimension_numbers<[1], [0], [0], [1], [0, 0, 1, 1], [], []>} : vector<144x108xbf16>, vector<108x6xbf16>, vector<144x6xf32> -> vector<144x6xf32>
    %c0_3 = arith.constant 0 : index
    %c0_4 = arith.constant 0 : index
    %3 = vector.load %arg3[%c0_3, %c0_4] : memref<1x6xf32, #tpu.memory_space<vmem>>, vector<1x6xf32>
    %4 = vector.broadcast %3 : vector<1x6xf32> to vector<144x6xf32>
    %5 = arith.addf %2, %4 : vector<144x6xf32>
    %cst_5 = arith.constant 0.000000e+00 : f32
    %6 = vector.broadcast %cst_5 : f32 to vector<144x6xf32>
    %7 = arith.maximumf %5, %6 : vector<144x6xf32>
    %8 = arith.truncf %7 : vector<144x6xf32> to vector<144x6xbf16>
    %c0_6 = arith.constant 0 : index
    %c0_7 = arith.constant 0 : index
    %9 = vector.load %arg4[%c0_6, %c0_7] : memref<144x6xbf16, #tpu.memory_space<vmem>>, vector<144x6xbf16>
    tpu.vector_store %arg4[%c0_6, %c0_7], %8 {strides = array<i32>} : memref<144x6xbf16, #tpu.memory_space<vmem>>, vector<144x6xbf16>,
    return
  }
  func.func @transform_0(%arg0: i32) -> (i32, i32) {
    %c0_i32 = arith.constant 0 : i32
    %c0_i32_0 = arith.constant 0 : i32
    return %arg0, %c0_i32 : i32, i32
  }
  func.func @transform_1(%arg0: i32) -> (i32, i32) {
    %c0_i32 = arith.constant 0 : i32
    %c0_i32_0 = arith.constant 0 : i32
    %c0_i32_1 = arith.constant 0 : i32
    return %c0_i32, %c0_i32_0 : i32, i32
  }
  func.func @transform_2(%arg0: i32) -> (i32, i32) {
    %c0_i32 = arith.constant 0 : i32
    %c0_i32_0 = arith.constant 0 : i32
    %c0_i32_1 = arith.constant 0 : i32
    return %c0_i32, %c0_i32_0 : i32, i32
  }
  func.func @transform_3(%arg0: i32) -> (i32, i32) {
    %c0_i32 = arith.constant 0 : i32
    %c0_i32_0 = arith.constant 0 : i32
    return %arg0, %c0_i32 : i32, i32
  }
}

module attributes {stable_mosaic.version = 11 : i64} {
  func.func @_conv_gemm_kernel(%arg0: i32, %arg1: memref<24x81xbf16, #tpu.memory_space<vmem>>, %arg2: memref<81x4xbf16, #tpu.memory_space<vmem>>, %arg3: memref<1x4xf32, #tpu.memory_space<vmem>>, %arg4: memref<24x4xbf16, #tpu.memory_space<vmem>>) attributes {dimension_semantics = [#tpu.dimension_semantics<parallel>], iteration_bounds = array<i64: 2>, scalar_prefetch = 0 : i64, scratch_operands = 0 : i64, tpu.core_type = #tpu.core_type<tc>, window_params = [{transform_indices = @transform_0, window_bounds = array<i64: 24, 81>}, {pipeline_mode = #tpu.pipeline_mode<synchronous>, transform_indices = @transform_1, window_bounds = array<i64: 81, 4>}, {pipeline_mode = #tpu.pipeline_mode<synchronous>, transform_indices = @transform_2, window_bounds = array<i64: 1, 4>}, {transform_indices = @transform_3, window_bounds = array<i64: 24, 4>}]} {
    %c0 = arith.constant 0 : index
    %c0_0 = arith.constant 0 : index
    %0 = vector.load %arg1[%c0, %c0_0] : memref<24x81xbf16, #tpu.memory_space<vmem>>, vector<24x81xbf16>
    %c0_1 = arith.constant 0 : index
    %c0_2 = arith.constant 0 : index
    %1 = vector.load %arg2[%c0_1, %c0_2] : memref<81x4xbf16, #tpu.memory_space<vmem>>, vector<81x4xbf16>
    %cst = arith.constant dense<0.000000e+00> : vector<24x4xf32>
    %2 = tpu.matmul %0, %1, %cst {dimension_numbers = #tpu.dot_dimension_numbers<[1], [0], [0], [1], [0, 0, 1, 1], [], []>} : vector<24x81xbf16>, vector<81x4xbf16>, vector<24x4xf32> -> vector<24x4xf32>
    %c0_3 = arith.constant 0 : index
    %c0_4 = arith.constant 0 : index
    %3 = vector.load %arg3[%c0_3, %c0_4] : memref<1x4xf32, #tpu.memory_space<vmem>>, vector<1x4xf32>
    %4 = vector.broadcast %3 : vector<1x4xf32> to vector<24x4xf32>
    %5 = arith.addf %2, %4 : vector<24x4xf32>
    %cst_5 = arith.constant 0.000000e+00 : f32
    %6 = vector.broadcast %cst_5 : f32 to vector<24x4xf32>
    %7 = arith.maximumf %5, %6 : vector<24x4xf32>
    %8 = arith.truncf %7 : vector<24x4xf32> to vector<24x4xbf16>
    %c0_6 = arith.constant 0 : index
    %c0_7 = arith.constant 0 : index
    %9 = vector.load %arg4[%c0_6, %c0_7] : memref<24x4xbf16, #tpu.memory_space<vmem>>, vector<24x4xbf16>
    tpu.vector_store %arg4[%c0_6, %c0_7], %8 {strides = array<i32>} : memref<24x4xbf16, #tpu.memory_space<vmem>>, vector<24x4xbf16>,
    return
  }
  func.func @transform_0(%arg0: i32) -> (i32, i32) {
    %c0_i32 = arith.constant 0 : i32
    %c0_i32_0 = arith.constant 0 : i32
    return %arg0, %c0_i32 : i32, i32
  }
  func.func @transform_1(%arg0: i32) -> (i32, i32) {
    %c0_i32 = arith.constant 0 : i32
    %c0_i32_0 = arith.constant 0 : i32
    %c0_i32_1 = arith.constant 0 : i32
    return %c0_i32, %c0_i32_0 : i32, i32
  }
  func.func @transform_2(%arg0: i32) -> (i32, i32) {
    %c0_i32 = arith.constant 0 : i32
    %c0_i32_0 = arith.constant 0 : i32
    %c0_i32_1 = arith.constant 0 : i32
    return %c0_i32, %c0_i32_0 : i32, i32
  }
  func.func @transform_3(%arg0: i32) -> (i32, i32) {
    %c0_i32 = arith.constant 0 : i32
    %c0_i32_0 = arith.constant 0 : i32
    return %arg0, %c0_i32 : i32, i32
  }
}

module attributes {stable_mosaic.version = 11 : i64} {
  func.func @_fused_fc_head_kernel(%arg0: i32, %arg1: memref<2x864xbf16, #tpu.memory_space<vmem>>, %arg2: memref<2x96xbf16, #tpu.memory_space<vmem>>, %arg3: memref<864x32xbf16, #tpu.memory_space<vmem>>, %arg4: memref<1x32xf32, #tpu.memory_space<vmem>>, %arg5: memref<96x16xbf16, #tpu.memory_space<vmem>>, %arg6: memref<1x16xf32, #tpu.memory_space<vmem>>, %arg7: memref<32x32xbf16, #tpu.memory_space<vmem>>, %arg8: memref<16x32xbf16, #tpu.memory_space<vmem>>, %arg9: memref<1x32xf32, #tpu.memory_space<vmem>>, %arg10: memref<32x3xbf16, #tpu.memory_space<vmem>>, %arg11: memref<1x3xf32, #tpu.memory_space<vmem>>, %arg12: memref<2x3xf32, #tpu.memory_space<vmem>>) attributes {dimension_semantics = [#tpu.dimension_semantics<arbitrary>], iteration_bounds = array<i64: 1>, scalar_prefetch = 0 : i64, scratch_operands = 0 : i64, tpu.core_type = #tpu.core_type<tc>, window_params = [{pipeline_mode = #tpu.pipeline_mode<synchronous>, transform_indices = @transform_0, window_bounds = array<i64: 2, 864>}, {pipeline_mode = #tpu.pipeline_mode<synchronous>, transform_indices = @transform_1, window_bounds = array<i64: 2, 96>}, {pipeline_mode = #tpu.pipeline_mode<synchronous>, transform_indices = @transform_2, window_bounds = array<i64: 864, 32>}, {pipeline_mode = #tpu.pipeline_mode<synchronous>, transform_indices = @transform_3, window_bounds = array<i64: 1, 32>}, {pipeline_mode = #tpu.pipeline_mode<synchronous>, transform_indices = @transform_4, window_bounds = array<i64: 96, 16>}, {pipeline_mode = #tpu.pipeline_mode<synchronous>, transform_indices = @transform_5, window_bounds = array<i64: 1, 16>}, {pipeline_mode = #tpu.pipeline_mode<synchronous>, transform_indices = @transform_6, window_bounds = array<i64: 32, 32>}, {pipeline_mode = #tpu.pipeline_mode<synchronous>, transform_indices = @transform_7, window_bounds = array<i64: 16, 32>}, {pipeline_mode = #tpu.pipeline_mode<synchronous>, transform_indices = @transform_8, window_bounds = array<i64: 1, 32>}, {pipeline_mode = #tpu.pipeline_mode<synchronous>, transform_indices = @transform_9, window_bounds = array<i64: 32, 3>}, {pipeline_mode = #tpu.pipeline_mode<synchronous>, transform_indices = @transform_10, window_bounds = array<i64: 1, 3>}, {pipeline_mode = #tpu.pipeline_mode<synchronous>, transform_indices = @transform_11, window_bounds = array<i64: 2, 3>}]} {
    %c0 = arith.constant 0 : index
    %c0_0 = arith.constant 0 : index
    %0 = vector.load %arg1[%c0, %c0_0] : memref<2x864xbf16, #tpu.memory_space<vmem>>, vector<2x864xbf16>
    %c0_1 = arith.constant 0 : index
    %c0_2 = arith.constant 0 : index
    %1 = vector.load %arg3[%c0_1, %c0_2] : memref<864x32xbf16, #tpu.memory_space<vmem>>, vector<864x32xbf16>
    %cst = arith.constant dense<0.000000e+00> : vector<2x32xf32>
    %2 = tpu.matmul %0, %1, %cst {dimension_numbers = #tpu.dot_dimension_numbers<[1], [0], [0], [1], [0, 0, 1, 1], [], []>} : vector<2x864xbf16>, vector<864x32xbf16>, vector<2x32xf32> -> vector<2x32xf32>
    %c0_3 = arith.constant 0 : index
    %c0_4 = arith.constant 0 : index
    %3 = vector.load %arg4[%c0_3, %c0_4] : memref<1x32xf32, #tpu.memory_space<vmem>>, vector<1x32xf32>
    %4 = vector.broadcast %3 : vector<1x32xf32> to vector<2x32xf32>
    %5 = arith.addf %2, %4 : vector<2x32xf32>
    %cst_5 = arith.constant 0.000000e+00 : f32
    %6 = vector.broadcast %cst_5 : f32 to vector<2x32xf32>
    %7 = arith.maximumf %5, %6 : vector<2x32xf32>
    %c0_6 = arith.constant 0 : index
    %c0_7 = arith.constant 0 : index
    %8 = vector.load %arg2[%c0_6, %c0_7] : memref<2x96xbf16, #tpu.memory_space<vmem>>, vector<2x96xbf16>
    %c0_8 = arith.constant 0 : index
    %c0_9 = arith.constant 0 : index
    %9 = vector.load %arg5[%c0_8, %c0_9] : memref<96x16xbf16, #tpu.memory_space<vmem>>, vector<96x16xbf16>
    %cst_10 = arith.constant dense<0.000000e+00> : vector<2x16xf32>
    %10 = tpu.matmul %8, %9, %cst_10 {dimension_numbers = #tpu.dot_dimension_numbers<[1], [0], [0], [1], [0, 0, 1, 1], [], []>} : vector<2x96xbf16>, vector<96x16xbf16>, vector<2x16xf32> -> vector<2x16xf32>
    %c0_11 = arith.constant 0 : index
    %c0_12 = arith.constant 0 : index
    %11 = vector.load %arg6[%c0_11, %c0_12] : memref<1x16xf32, #tpu.memory_space<vmem>>, vector<1x16xf32>
    %12 = vector.broadcast %11 : vector<1x16xf32> to vector<2x16xf32>
    %13 = arith.addf %10, %12 : vector<2x16xf32>
    %cst_13 = arith.constant 0.000000e+00 : f32
    %14 = vector.broadcast %cst_13 : f32 to vector<2x16xf32>
    %15 = arith.maximumf %13, %14 : vector<2x16xf32>
    %16 = arith.truncf %7 : vector<2x32xf32> to vector<2x32xbf16>
    %c0_14 = arith.constant 0 : index
    %c0_15 = arith.constant 0 : index
    %17 = vector.load %arg7[%c0_14, %c0_15] : memref<32x32xbf16, #tpu.memory_space<vmem>>, vector<32x32xbf16>
    %cst_16 = arith.constant dense<0.000000e+00> : vector<2x32xf32>
    %18 = tpu.matmul %16, %17, %cst_16 {dimension_numbers = #tpu.dot_dimension_numbers<[1], [0], [0], [1], [0, 0, 1, 1], [], []>} : vector<2x32xbf16>, vector<32x32xbf16>, vector<2x32xf32> -> vector<2x32xf32>
    %19 = arith.truncf %15 : vector<2x16xf32> to vector<2x16xbf16>
    %c0_17 = arith.constant 0 : index
    %c0_18 = arith.constant 0 : index
    %20 = vector.load %arg8[%c0_17, %c0_18] : memref<16x32xbf16, #tpu.memory_space<vmem>>, vector<16x32xbf16>
    %cst_19 = arith.constant dense<0.000000e+00> : vector<2x32xf32>
    %21 = tpu.matmul %19, %20, %cst_19 {dimension_numbers = #tpu.dot_dimension_numbers<[1], [0], [0], [1], [0, 0, 1, 1], [], []>} : vector<2x16xbf16>, vector<16x32xbf16>, vector<2x32xf32> -> vector<2x32xf32>
    %22 = arith.addf %18, %21 : vector<2x32xf32>
    %c0_20 = arith.constant 0 : index
    %c0_21 = arith.constant 0 : index
    %23 = vector.load %arg9[%c0_20, %c0_21] : memref<1x32xf32, #tpu.memory_space<vmem>>, vector<1x32xf32>
    %24 = vector.broadcast %23 : vector<1x32xf32> to vector<2x32xf32>
    %25 = arith.addf %22, %24 : vector<2x32xf32>
    %cst_22 = arith.constant 0.000000e+00 : f32
    %26 = vector.broadcast %cst_22 : f32 to vector<2x32xf32>
    %27 = arith.maximumf %25, %26 : vector<2x32xf32>
    %28 = arith.truncf %27 : vector<2x32xf32> to vector<2x32xbf16>
    %c0_23 = arith.constant 0 : index
    %c0_24 = arith.constant 0 : index
    %29 = vector.load %arg10[%c0_23, %c0_24] : memref<32x3xbf16, #tpu.memory_space<vmem>>, vector<32x3xbf16>
    %cst_25 = arith.constant dense<0.000000e+00> : vector<2x3xf32>
    %30 = tpu.matmul %28, %29, %cst_25 {dimension_numbers = #tpu.dot_dimension_numbers<[1], [0], [0], [1], [0, 0, 1, 1], [], []>} : vector<2x32xbf16>, vector<32x3xbf16>, vector<2x3xf32> -> vector<2x3xf32>
    %c0_26 = arith.constant 0 : index
    %c0_27 = arith.constant 0 : index
    %31 = vector.load %arg11[%c0_26, %c0_27] : memref<1x3xf32, #tpu.memory_space<vmem>>, vector<1x3xf32>
    %32 = vector.broadcast %31 : vector<1x3xf32> to vector<2x3xf32>
    %33 = arith.addf %30, %32 : vector<2x3xf32>
    %c0_28 = arith.constant 0 : index
    %c0_29 = arith.constant 0 : index
    %34 = vector.load %arg12[%c0_28, %c0_29] : memref<2x3xf32, #tpu.memory_space<vmem>>, vector<2x3xf32>
    tpu.vector_store %arg12[%c0_28, %c0_29], %33 {strides = array<i32>} : memref<2x3xf32, #tpu.memory_space<vmem>>, vector<2x3xf32>,
    return
  }
  func.func @transform_0(%arg0: i32) -> (i32, i32) {
    %c0_i32 = arith.constant 0 : i32
    %c0_i32_0 = arith.constant 0 : i32
    %c0_i32_1 = arith.constant 0 : i32
    return %c0_i32, %c0_i32_0 : i32, i32
  }
  func.func @transform_1(%arg0: i32) -> (i32, i32) {
    %c0_i32 = arith.constant 0 : i32
    %c0_i32_0 = arith.constant 0 : i32
    %c0_i32_1 = arith.constant 0 : i32
    return %c0_i32, %c0_i32_0 : i32, i32
  }
  func.func @transform_2(%arg0: i32) -> (i32, i32) {
    %c0_i32 = arith.constant 0 : i32
    %c0_i32_0 = arith.constant 0 : i32
    %c0_i32_1 = arith.constant 0 : i32
    return %c0_i32, %c0_i32_0 : i32, i32
  }
  func.func @transform_3(%arg0: i32) -> (i32, i32) {
    %c0_i32 = arith.constant 0 : i32
    %c0_i32_0 = arith.constant 0 : i32
    %c0_i32_1 = arith.constant 0 : i32
    return %c0_i32, %c0_i32_0 : i32, i32
  }
  func.func @transform_4(%arg0: i32) -> (i32, i32) {
    %c0_i32 = arith.constant 0 : i32
    %c0_i32_0 = arith.constant 0 : i32
    %c0_i32_1 = arith.constant 0 : i32
    return %c0_i32, %c0_i32_0 : i32, i32
  }
  func.func @transform_5(%arg0: i32) -> (i32, i32) {
    %c0_i32 = arith.constant 0 : i32
    %c0_i32_0 = arith.constant 0 : i32
    %c0_i32_1 = arith.constant 0 : i32
    return %c0_i32, %c0_i32_0 : i32, i32
  }
  func.func @transform_6(%arg0: i32) -> (i32, i32) {
    %c0_i32 = arith.constant 0 : i32
    %c0_i32_0 = arith.constant 0 : i32
    %c0_i32_1 = arith.constant 0 : i32
    return %c0_i32, %c0_i32_0 : i32, i32
  }
  func.func @transform_7(%arg0: i32) -> (i32, i32) {
    %c0_i32 = arith.constant 0 : i32
    %c0_i32_0 = arith.constant 0 : i32
    %c0_i32_1 = arith.constant 0 : i32
    return %c0_i32, %c0_i32_0 : i32, i32
  }
  func.func @transform_8(%arg0: i32) -> (i32, i32) {
    %c0_i32 = arith.constant 0 : i32
    %c0_i32_0 = arith.constant 0 : i32
    %c0_i32_1 = arith.constant 0 : i32
    return %c0_i32, %c0_i32_0 : i32, i32
  }
  func.func @transform_9(%arg0: i32) -> (i32, i32) {
    %c0_i32 = arith.constant 0 : i32
    %c0_i32_0 = arith.constant 0 : i32
    %c0_i32_1 = arith.constant 0 : i32
    return %c0_i32, %c0_i32_0 : i32, i32
  }
  func.func @transform_10(%arg0: i32) -> (i32, i32) {
    %c0_i32 = arith.constant 0 : i32
    %c0_i32_0 = arith.constant 0 : i32
    %c0_i32_1 = arith.constant 0 : i32
    return %c0_i32, %c0_i32_0 : i32, i32
  }
  func.func @transform_11(%arg0: i32) -> (i32, i32) {
    %c0_i32 = arith.constant 0 : i32
    %c0_i32_0 = arith.constant 0 : i32
    %c0_i32_1 = arith.constant 0 : i32
    return %c0_i32, %c0_i32_0 : i32, i32
  }
}

</mosaic_0001>

<llo_original>
// kernel: c3d_forward.4
$region0: #{c3d_forward.4}
  #allocation0 [shape = 'u32[]', space=smem, size = 0x4, offset = 0x4, fixed_abs, tag = 'smem constant byte address 0x4 - core index']
  #allocation1 [shape = 'u32[72,128]{1,0:T(1,128)}', space=vmem, size = 0x9000, scoped, tag = 'internal scratch']
  %s0 = inlined_call_operand.vmem [shape: bf16[1176,81], index: 0, kind: input, shape index: {}]
  %s1 = inlined_call_operand.vmem [shape: bf16[81,4], index: 1, kind: input, shape index: {}]
  %s2 = inlined_call_operand.vmem [shape: f32[1,4], index: 2, kind: input, shape index: {}]
  %s3 = inlined_call_operand.vmem [shape: bf16[1176,4], index: 3, kind: output, shape index: {}]
  %s4 = sld [smem:[#allocation0]]
  $region45: #{c3d_forward.4} parent=0
    _
  %s6 = ssub.s32 1, %s4
  %s7 = scalar_select 0, %s6, %s4
  loop: start=0, step=1, limit=5
  $region2: #{c3d_forward.4} parent=0 // loop_pre_header
    _
  $region3: #{c3d_forward.4} parent=0 // loop_header
    %s9 = sphi 0, %s13
    %p10 = scmp.ge.s32.totalorder %s9, 5
    %s19 = sphi 0, %s21
    %s22 = sphi 0, %s19
    %s23 = sphi 0, %s22
    %s39 = sphi 0, %s23
    %s43 = sphi 0, %s43
    %s45 = sphi 0, %s43
    %s46 = sphi 0, %s45
    %s60 = sphi 0, %s46
    %s64 = sphi 0, %s64
    %s66 = sphi 0, %s64
    %s67 = sphi 0, %s66
    %s81 = sphi 0, %s67
    %s87 = sphi 0, %s89
    %s90 = sphi 0, %s87
    %s91 = sphi 0, %s90
    %s107 = sphi 0, %s91
  $region4: #{c3d_forward.4} parent=0 // loop_header_branch
    %12 = sbr.rel (%p10) target = $region8
  $region5: #{c3d_forward.4} parent=0 // loop_body
    %s14 = ssub.s32 %s9, 1
    %s15 = ssub.s32 %s9, 2
    %s16 = sadd.s32 %s9, 1
    %s17 = ssub.s32 %s9, %s16
    %p18 = scmp.eq.s32.totalorder %s17, 0
    %s20 = sadd.s32 %s19, 1
    %s21 = scalar_select %p18, %s19, %s20
    %p24 = pneg %p18
    %p25 = scmp.eq.s32.totalorder %s9, 2
    %p26 = por %p24, %p25
    %p27 = scmp.ne.s32.totalorder %s19, %s22
    %p28 = scmp.eq.s32.totalorder %s9, 0
    %p29 = por %p27, %p28
    %p30 = scmp.ne.s32.totalorder %s19, %s22
    %p31 = scmp.eq.s32.totalorder %s14, 2
    %p32 = por %p30, %p31
    %p33 = scmp.ne.s32.totalorder %s22, %s23
    %p34 = scmp.eq.s32.totalorder %s14, 0
    %p35 = por %p33, %p34
    %p36 = scmp.ne.s32.totalorder %s22, %s23
    %p37 = scmp.eq.s32.totalorder %s15, 2
    %p38 = por %p36, %p37
    %p40 = scmp.ne.s32.totalorder %s23, %s39
    %p41 = scmp.eq.s32.totalorder %s15, 0
    %p42 = por %p40, %p41
    %s44 = sadd.s32 %s43, 1
    %p47 = scmp.eq.s32.totalorder %s9, 2
    %p48 = scmp.ne.s32.totalorder %s43, %s45
    %p49 = scmp.eq.s32.totalorder %s9, 0
    %p50 = por %p48, %p49
    %p51 = scmp.ne.s32.totalorder %s43, %s45
    %p52 = scmp.eq.s32.totalorder %s14, 2
    %p53 = por %p51, %p52
    %p54 = scmp.ne.s32.totalorder %s45, %s46
    %p55 = scmp.eq.s32.totalorder %s14, 0
    %p56 = por %p54, %p55
    %p57 = scmp.ne.s32.totalorder %s45, %s46
    %p58 = scmp.eq.s32.totalorder %s15, 2
    %p59 = por %p57, %p58
    %p61 = scmp.ne.s32.totalorder %s46, %s60
    %p62 = scmp.eq.s32.totalorder %s15, 0
    %p63 = por %p61, %p62
    %s65 = sadd.s32 %s64, 1
    %p68 = scmp.eq.s32.totalorder %s9, 2
    %p69 = scmp.ne.s32.totalorder %s64, %s66
    %p70 = scmp.eq.s32.totalorder %s9, 0
    %p71 = por %p69, %p70
    %p72 = scmp.ne.s32.totalorder %s64, %s66
    %p73 = scmp.eq.s32.totalorder %s14, 2
    %p74 = por %p72, %p73
    %p75 = scmp.ne.s32.totalorder %s66, %s67
    %p76 = scmp.eq.s32.totalorder %s14, 0
    %p77 = por %p75, %p76
    %p78 = scmp.ne.s32.totalorder %s66, %s67
    %p79 = scmp.eq.s32.totalorder %s15, 2
    %p80 = por %p78, %p79
    %p82 = scmp.ne.s32.totalorder %s67, %s81
    %p83 = scmp.eq.s32.totalorder %s15, 0
    %p84 = por %p82, %p83
    %s85 = ssub.s32 %s9, %s16
    %p86 = scmp.eq.s32.totalorder %s85, 0
    %s88 = sadd.s32 %s87, 1
    %s89 = scalar_select %p86, %s87, %s88
    %p92 = pneg %p86
    %p93 = scmp.eq.s32.totalorder %s9, 2
    %p94 = por %p92, %p93
    %p95 = scmp.ne.s32.totalorder %s87, %s90
    %p96 = scmp.eq.s32.totalorder %s9, 0
    %p97 = por %p95, %p96
    %p98 = scmp.ne.s32.totalorder %s87, %s90
    %p99 = scmp.eq.s32.totalorder %s14, 2
    %p100 = por %p98, %p99
    %p101 = scmp.ne.s32.totalorder %s90, %s91
    %p102 = scmp.eq.s32.totalorder %s14, 0
    %p103 = por %p101, %p102
    %p104 = scmp.ne.s32.totalorder %s90, %s91
    %p105 = scmp.eq.s32.totalorder %s15, 2
    %p106 = por %p104, %p105
    %p108 = scmp.ne.s32.totalorder %s91, %s107
    %p109 = scmp.eq.s32.totalorder %s15, 0
    %p110 = por %p108, %p109
    %p111 = scmp.le.s32.totalorder 1, %s9
    %p112 = scmp.lt.s32.totalorder %s9, 4
    %p113 = pnand %p111, %p112
    %p114 = pneg %p113
    // Predicated region
    $region9: #{c3d_forward.4} parent=5 // pred_check
      _
    $region10: #{c3d_forward.4} parent=5 // pred_check_branch
      %116 = sbr.rel (%p113) target = $region12
    $region11: #{c3d_forward.4} parent=5 // pred_region
      %s117 = ssub.s32 %s9, 1
      // Predicated region
      $region13: #{c3d_forward.4} parent=11 // pred_check
        %p118 = pneg %p56
      $region14: #{c3d_forward.4} parent=11 // pred_check_branch
        %120 = sbr.rel (%p118) target = $region16
      $region15: #{c3d_forward.4} parent=11 // pred_region
        _
      $region16: #{c3d_forward.4} parent=11 // pred_fallthru
        _
      // Predicated region
      $region17: #{c3d_forward.4} parent=11 // pred_check
        %p121 = pneg %p77
      $region18: #{c3d_forward.4} parent=11 // pred_check_branch
        %123 = sbr.rel (%p121) target = $region20
      $region19: #{c3d_forward.4} parent=11 // pred_region
        _
      $region20: #{c3d_forward.4} parent=11 // pred_fallthru
        _
    $region12: #{c3d_forward.4} parent=5 // pred_fallthru
      _
    %p124 = scmp.lt.s32.totalorder %s9, 3
    // Predicated region
    $region21: #{c3d_forward.4} parent=5 // pred_check
      %p125 = pneg %p124
    $region22: #{c3d_forward.4} parent=5 // pred_check_branch
      %127 = sbr.rel (%p125) target = $region24
    $region23: #{c3d_forward.4} parent=5 // pred_region
      // Predicated region
      $region25: #{c3d_forward.4} parent=23 // pred_check
        %p128 = pneg %p29
      $region26: #{c3d_forward.4} parent=23 // pred_check_branch
        %130 = sbr.rel (%p128) target = $region28
      $region27: #{c3d_forward.4} parent=23 // pred_region
        %s131 = smul.u32 49, %s9
        %p132 = scmp.lt.s32.totalorder %s131, 146
        %s133 = scalar_select %p132, %s131, 146
        %s134 = smul.addr %s133, 4
        %s135 = scalar_lea.vmem %s0, %s134
        %s136 = smul.u32 49, %s9
      $region28: #{c3d_forward.4} parent=23 // pred_fallthru
        _
    $region24: #{c3d_forward.4} parent=5 // pred_fallthru
      _
    %p137 = scmp.le.s32.totalorder 1, %s9
    %p138 = scmp.lt.s32.totalorder %s9, 4
    %p139 = pnand %p137, %p138
    %p140 = pneg %p139
    // Predicated region
    $region29: #{c3d_forward.4} parent=5 // pred_check
      _
    $region30: #{c3d_forward.4} parent=5 // pred_check_branch
      %142 = sbr.rel (%p139) target = $region32
    $region31: #{c3d_forward.4} parent=5 // pred_region
      %s143 = ssub.s32 %s9, 1
      %s144 = smul.u32 49, %s14
      %p145 = scmp.lt.s32.totalorder %s144, 146
      %s146 = scalar_select %p145, %s144, 146
      %s147 = smul.addr %s146, 4
      %s148 = scalar_lea.vmem %s0, %s147
      %p149 = pneg %p35
      %p150 = pneg %p32
      %p151 = pneg %p56
      %p152 = pneg %p53
      %p153 = pneg %p77
      %p154 = pneg %p74
      %p155 = pneg %p103
      %p156 = pneg %p100
      %s157 = smul.u32 49, %s14
      %p158 = scmp.lt.s32.totalorder %s157, 146
      %s159 = scalar_select %p158, %s157, 146
      %s160 = smul.addr %s159, 4
      %s161 = scalar_lea.vmem %s3, %s160
      %s162 = smul.u32 49, %s14
      %p163 = scmp.lt.s32.totalorder %s162, 146
      %s164 = scalar_select %p163, %s162, 146
      %s165 = smul.addr %s164, 4
      %s166 = scalar_lea.vmem %s0, %s165
      %s167 = smul.u32 49, %s14
      %s168 = smul.u32 49, %s14
      %p169 = scmp.lt.s32.totalorder %s168, 146
      %s170 = scalar_select %p169, %s168, 146
      %s171 = smul.addr %s170, 4
      %s172 = scalar_lea.vmem %s3, %s171
      %s173 = smul.u32 49, %s14
      %v175 = vld [vmem:[%s166] sm:$0xf]
      %v176 = vld [vmem:[%s166 + $0x4] sm:$0xf]
      %v177 = vld [vmem:[%s166 + $0x8] sm:$0xf]
      %v178 = vld [vmem:[%s166 + $0xc] sm:$0xf]
      %v179 = vld [vmem:[%s166 + $0x10] sm:$0xf]
      %v180 = vld [vmem:[%s166 + $0x14] sm:$0xf]
      %v181 = vld [vmem:[%s166 + $0x18] sm:$0xf]
      %v182 = vld [vmem:[%s166 + $0x1c] sm:$0xf]
      %v183 = vld [vmem:[%s166 + $0x20] sm:$0xf]
      %v184 = vld [vmem:[%s166 + $0x24] sm:$0xf]
      %v185 = vld [vmem:[%s166 + $0x28] sm:$0xf]
      %v186 = vld [vmem:[%s166 + $0x2c] sm:$0xf]
      %v187 = vld [vmem:[%s166 + $0x30] sm:$0xf]
      %v188 = vld [vmem:[%s166 + $0x34] sm:$0xf]
      %v189 = vld [vmem:[%s166 + $0x38] sm:$0xf]
      %v190 = vld [vmem:[%s166 + $0x3c] sm:$0xf]
      %v191 = vld [vmem:[%s166 + $0x40] sm:$0xf]
      %v192 = vld [vmem:[%s166 + $0x44] sm:$0xf]
      %v193 = vld [vmem:[%s166 + $0x48] sm:$0xf]
      %v194 = vld [vmem:[%s166 + $0x4c] sm:$0xf]
      %v195 = vld [vmem:[%s166 + $0x50] sm:$0xf]
      %v196 = vld [vmem:[%s166 + $0x54] sm:$0xf]
      %v197 = vld [vmem:[%s166 + $0x58] sm:$0xf]
      %v198 = vld [vmem:[%s166 + $0x5c] sm:$0xf]
      %v199 = vld [vmem:[%s166 + $0x60] sm:$0xf]
      %v200 = vld [vmem:[%s166 + $0x64] sm:$0xf]
      %v201 = vld [vmem:[%s166 + $0x68] sm:$0xf]
      %v202 = vld [vmem:[%s166 + $0x6c] sm:$0xf]
      %v203 = vld [vmem:[%s166 + $0x70] sm:$0xf]
      %v204 = vld [vmem:[%s166 + $0x74] sm:$0xf]
      %v205 = vld [vmem:[%s166 + $0x78] sm:$0xf]
      %v206 = vld [vmem:[%s166 + $0x7c] sm:$0xf]
      %v207 = vld [vmem:[%s166 + $0x80] sm:$0xf]
      %v208 = vld [vmem:[%s166 + $0x84] sm:$0xf]
      %v209 = vld [vmem:[%s166 + $0x88] sm:$0xf]
      %v210 = vld [vmem:[%s166 + $0x8c] sm:$0xf]
      %v211 = vld [vmem:[%s166 + $0x90] sm:$0xf]
      %v212 = vld [vmem:[%s166 + $0x94] sm:$0xf]
      %v213 = vld [vmem:[%s166 + $0x98] sm:$0xf]
      %v214 = vld [vmem:[%s166 + $0x9c] sm:$0xf]
      %v215 = vld [vmem:[%s166 + $0xa0] sm:$0xf]
      %v216 = vld [vmem:[%s166 + $0xa4] sm:$0xf]
      %v217 = vld [vmem:[%s166 + $0xa8] sm:$0xf]
      %v218 = vld [vmem:[%s166 + $0xac] sm:$0xf]
      %v219 = vld [vmem:[%s166 + $0xb0] sm:$0xf]
      %v220 = vld [vmem:[%s166 + $0xb4] sm:$0xf]
      %v221 = vld [vmem:[%s166 + $0xb8] sm:$0xf]
      %v222 = vld [vmem:[%s166 + $0xbc] sm:$0xf]
      %v223 = vld [vmem:[%s166 + $0xc0] sm:$0xf]
      %v224 = vld [vmem:[%s1] sm:$0xf]
      %v225 = vld [vmem:[%s1 + $0x4] sm:$0xf]
      %v226 = vld [vmem:[%s1 + $0x8] sm:$0xf]
      %v227 = vld [vmem:[%s1 + $0xc] sm:$0xf]
      %v228 = vld [vmem:[%s1 + $0x10] sm:$0xf]
      %v229 = vld [vmem:[%s1 + $0x14] sm:$0xf]
      %v230 = vld [vmem:[%s1 + $0x18] sm:$0xf]
      %v231 = vld [vmem:[%s1 + $0x1c] sm:$0xf]
      %v232 = vld [vmem:[%s1 + $0x20] sm:$0xf]
      %v233 = vld [vmem:[%s1 + $0x24] sm:$0xf]
      %v234 = vld [vmem:[%s1 + $0x28] sm:$0x1]
      %v235 = vld [vmem:[%s2] sm:$0x1]
      %v237 = vperm.slane %v235, 0
      %v288 = vunpack.c.l.b16 %v175
      %v289 = vunpack.c.l.b16 %v176
      %v290 = vunpack.c.l.b16 %v177
      %v291 = vunpack.c.l.b16 %v178
      %v292 = vunpack.c.l.b16 %v179
      %v293 = vunpack.c.l.b16 %v180
      %v294 = vunpack.c.l.b16 %v181
      %v295 = vunpack.c.l.b16 %v182
      %v296 = vunpack.c.l.b16 %v183
      %v297 = vunpack.c.l.b16 %v184
      %v298 = vunpack.c.l.b16 %v185
      %v299 = vunpack.c.l.b16 %v186
      %v300 = vunpack.c.l.b16 %v187
      %v301 = vunpack.c.l.b16 %v188
      %v302 = vunpack.c.l.b16 %v189
      %v303 = vunpack.c.l.b16 %v190
      %v304 = vunpack.c.l.b16 %v191
      %v305 = vunpack.c.l.b16 %v192
      %v306 = vunpack.c.l.b16 %v193
      %v307 = vunpack.c.l.b16 %v194
      %v308 = vunpack.c.l.b16 %v195
      %v309 = vunpack.c.l.b16 %v196
      %v310 = vunpack.c.l.b16 %v197
      %v311 = vunpack.c.l.b16 %v198
      %v312 = vunpack.c.l.b16 %v199
      %v313 = vunpack.c.l.b16 %v200
      %v314 = vunpack.c.l.b16 %v201
      %v315 = vunpack.c.l.b16 %v202
      %v316 = vunpack.c.l.b16 %v203
      %v317 = vunpack.c.l.b16 %v204
      %v318 = vunpack.c.l.b16 %v205
      %v319 = vunpack.c.l.b16 %v206
      %v320 = vunpack.c.l.b16 %v207
      %v321 = vunpack.c.l.b16 %v208
      %v322 = vunpack.c.l.b16 %v209
      %v323 = vunpack.c.l.b16 %v210
      %v324 = vunpack.c.l.b16 %v211
      %v325 = vunpack.c.l.b16 %v212
      %v326 = vunpack.c.l.b16 %v213
      %v327 = vunpack.c.l.b16 %v214
      %v328 = vunpack.c.l.b16 %v215
      %v329 = vunpack.c.l.b16 %v216
      %v330 = vunpack.c.l.b16 %v217
      %v331 = vunpack.c.l.b16 %v218
      %v332 = vunpack.c.l.b16 %v219
      %v333 = vunpack.c.l.b16 %v220
      %v334 = vunpack.c.l.b16 %v221
      %v335 = vunpack.c.l.b16 %v222
      %v336 = vunpack.c.l.b16 %v223
      %v337 = vpack.c.b16 %v289, %v288
      %v338 = vpack.c.b16 %v291, %v290
      %v339 = vpack.c.b16 %v293, %v292
      %v340 = vpack.c.b16 %v295, %v294
      %v341 = vpack.c.b16 %v297, %v296
      %v342 = vpack.c.b16 %v299, %v298
      %v343 = vpack.c.b16 %v301, %v300
      %v344 = vpack.c.b16 %v303, %v302
      %v345 = vpack.c.b16 %v305, %v304
      %v346 = vpack.c.b16 %v307, %v306
      %v347 = vpack.c.b16 %v309, %v308
      %v348 = vpack.c.b16 %v311, %v310
      %v349 = vpack.c.b16 %v313, %v312
      %v350 = vpack.c.b16 %v315, %v314
      %v351 = vpack.c.b16 %v317, %v316
      %v352 = vpack.c.b16 %v319, %v318
      %v353 = vpack.c.b16 %v321, %v320
      %v354 = vpack.c.b16 %v323, %v322
      %v355 = vpack.c.b16 %v325, %v324
      %v356 = vpack.c.b16 %v327, %v326
      %v357 = vpack.c.b16 %v329, %v328
      %v358 = vpack.c.b16 %v331, %v330
      %v359 = vpack.c.b16 %v333, %v332
      %v360 = vpack.c.b16 %v335, %v334
      %v361 = vpack.c.b16 %v336, %v336
      %v373 = vunpack.c.l.b16 %v224
      %v374 = vunpack.c.l.b16 %v225
      %v375 = vunpack.c.l.b16 %v226
      %v376 = vunpack.c.l.b16 %v227
      %v377 = vunpack.c.l.b16 %v228
      %v378 = vunpack.c.l.b16 %v229
      %v379 = vunpack.c.l.b16 %v230
      %v380 = vunpack.c.l.b16 %v231
      %v381 = vunpack.c.l.b16 %v232
      %v382 = vunpack.c.l.b16 %v233
      %v383 = vunpack.c.l.b16 %v234
      %v384 = vpack.c.b16 %v374, %v373
      %v385 = vpack.c.b16 %v376, %v375
      %v386 = vpack.c.b16 %v378, %v377
      %v387 = vpack.c.b16 %v380, %v379
      %v388 = vpack.c.b16 %v382, %v381
      %v389 = vpack.c.b16 %v383, %v383
      %vm395 = vcmask 662528
      %v397 = vsel %vm395, %v337, 0
      %v400 = vsel %vm395, %v338, 0
      %v403 = vsel %vm395, %v339, 0
      %v406 = vsel %vm395, %v340, 0
      %v409 = vsel %vm395, %v341, 0
      %v412 = vsel %vm395, %v342, 0
      %v415 = vsel %vm395, %v343, 0
      %v418 = vsel %vm395, %v344, 0
      %v421 = vsel %vm395, %v345, 0
      %v424 = vsel %vm395, %v346, 0
      %v427 = vsel %vm395, %v347, 0
      %v430 = vsel %vm395, %v348, 0
      %v433 = vsel %vm395, %v349, 0
      %v436 = vsel %vm395, %v350, 0
      %v439 = vsel %vm395, %v351, 0
      %v442 = vsel %vm395, %v352, 0
      %v445 = vsel %vm395, %v353, 0
      %v448 = vsel %vm395, %v354, 0
      %v451 = vsel %vm395, %v355, 0
      %v454 = vsel %vm395, %v356, 0
      %v457 = vsel %vm395, %v357, 0
      %v460 = vsel %vm395, %v358, 0
      %v463 = vsel %vm395, %v359, 0
      %v466 = vsel %vm395, %v360, 0
      %v469 = vsel %vm395, %v361, 0
      %vm471 = vcmask 1040384
      %v472 = vsel 0, 4294967295, 65535
      %v473 = vsel %vm471, %v472, 0
      %v475 = vand.u32 %v389, %v473
      %477 = vmatpush.bf16.msra.mxu0 0
      %478 = vmatpush.bf16.msra.mxu0 0
      %479 = vmatpush.bf16.msra.mxu0 %v475
      %480 = vmatpush.bf16.msra.mxu0 %v388
      %481 = vmatpush.bf16.msra.mxu0 %v387
      %482 = vmatpush.bf16.msra.mxu0 %v386
      %483 = vmatpush.bf16.msra.mxu0 %v385
      %484 = vmatpush.bf16.msra.mxu0 %v384
      %485 = vmatmul.bf16.gmra.mxu0 %v397
      %v486 = vpop.f32.mrf.mxu0
      %v487 = vadd.f32 %v237, %v486
      %v488 = vpop.f32.mrf.mxu0
      %v489 = vadd.f32 %v237, %v488
      %490 = vmatmul.bf16.gmra.mxu0 %v400
      %v491 = vpop.f32.mrf.mxu0
      %v492 = vadd.f32 %v237, %v491
      %v493 = vpop.f32.mrf.mxu0
      %v494 = vadd.f32 %v237, %v493
      %495 = vmatmul.bf16.gmra.mxu0 %v403
      %v496 = vpop.f32.mrf.mxu0
      %v497 = vadd.f32 %v237, %v496
      %v498 = vpop.f32.mrf.mxu0
      %v499 = vadd.f32 %v237, %v498
      %500 = vmatmul.bf16.gmra.mxu0 %v406
      %v501 = vpop.f32.mrf.mxu0
      %v502 = vadd.f32 %v237, %v501
      %v503 = vpop.f32.mrf.mxu0
      %v504 = vadd.f32 %v237, %v503
      %505 = vmatmul.bf16.gmra.mxu0 %v409
      %v506 = vpop.f32.mrf.mxu0
      %v507 = vadd.f32 %v237, %v506
      %v508 = vpop.f32.mrf.mxu0
      %v509 = vadd.f32 %v237, %v508
      %510 = vmatmul.bf16.gmra.mxu0 %v412
      %v511 = vpop.f32.mrf.mxu0
      %v512 = vadd.f32 %v237, %v511
      %v513 = vpop.f32.mrf.mxu0
      %v514 = vadd.f32 %v237, %v513
      %515 = vmatmul.bf16.gmra.mxu0 %v415
      %v516 = vpop.f32.mrf.mxu0
      %v517 = vadd.f32 %v237, %v516
      %v518 = vpop.f32.mrf.mxu0
      %v519 = vadd.f32 %v237, %v518
      %520 = vmatmul.bf16.gmra.mxu0 %v418
      %v521 = vpop.f32.mrf.mxu0
      %v522 = vadd.f32 %v237, %v521
      %v523 = vpop.f32.mrf.mxu0
      %v524 = vadd.f32 %v237, %v523
      %525 = vmatmul.bf16.gmra.mxu0 %v421
      %v526 = vpop.f32.mrf.mxu0
      %v527 = vadd.f32 %v237, %v526
      %v528 = vpop.f32.mrf.mxu0
      %v529 = vadd.f32 %v237, %v528
      %530 = vmatmul.bf16.gmra.mxu0 %v424
      %v531 = vpop.f32.mrf.mxu0
      %v532 = vadd.f32 %v237, %v531
      %v533 = vpop.f32.mrf.mxu0
      %v534 = vadd.f32 %v237, %v533
      %535 = vmatmul.bf16.gmra.mxu0 %v427
      %v536 = vpop.f32.mrf.mxu0
      %v537 = vadd.f32 %v237, %v536
      %v538 = vpop.f32.mrf.mxu0
      %v539 = vadd.f32 %v237, %v538
      %540 = vmatmul.bf16.gmra.mxu0 %v430
      %v541 = vpop.f32.mrf.mxu0
      %v542 = vadd.f32 %v237, %v541
      %v543 = vpop.f32.mrf.mxu0
      %v544 = vadd.f32 %v237, %v543
      %545 = vmatmul.bf16.gmra.mxu0 %v433
      %v546 = vpop.f32.mrf.mxu0
      %v547 = vadd.f32 %v237, %v546
      %v548 = vpop.f32.mrf.mxu0
      %v549 = vadd.f32 %v237, %v548
      %550 = vmatmul.bf16.gmra.mxu0 %v436
      %v551 = vpop.f32.mrf.mxu0
      %v552 = vadd.f32 %v237, %v551
      %v553 = vpop.f32.mrf.mxu0
      %v554 = vadd.f32 %v237, %v553
      %555 = vmatmul.bf16.gmra.mxu0 %v439
      %v556 = vpop.f32.mrf.mxu0
      %v557 = vadd.f32 %v237, %v556
      %v558 = vpop.f32.mrf.mxu0
      %v559 = vadd.f32 %v237, %v558
      %560 = vmatmul.bf16.gmra.mxu0 %v442
      %v561 = vpop.f32.mrf.mxu0
      %v562 = vadd.f32 %v237, %v561
      %v563 = vpop.f32.mrf.mxu0
      %v564 = vadd.f32 %v237, %v563
      %565 = vmatmul.bf16.gmra.mxu0 %v445
      %v566 = vpop.f32.mrf.mxu0
      %v567 = vadd.f32 %v237, %v566
      %v568 = vpop.f32.mrf.mxu0
      %v569 = vadd.f32 %v237, %v568
      %570 = vmatmul.bf16.gmra.mxu0 %v448
      %v571 = vpop.f32.mrf.mxu0
      %v572 = vadd.f32 %v237, %v571
      %v573 = vpop.f32.mrf.mxu0
      %v574 = vadd.f32 %v237, %v573
      %575 = vmatmul.bf16.gmra.mxu0 %v451
      %v576 = vpop.f32.mrf.mxu0
      %v577 = vadd.f32 %v237, %v576
      %v578 = vpop.f32.mrf.mxu0
      %v579 = vadd.f32 %v237, %v578
      %580 = vmatmul.bf16.gmra.mxu0 %v454
      %v581 = vpop.f32.mrf.mxu0
      %v582 = vadd.f32 %v237, %v581
      %v583 = vpop.f32.mrf.mxu0
      %v584 = vadd.f32 %v237, %v583
      %585 = vmatmul.bf16.gmra.mxu0 %v457
      %v586 = vpop.f32.mrf.mxu0
      %v587 = vadd.f32 %v237, %v586
      %v588 = vpop.f32.mrf.mxu0
      %v589 = vadd.f32 %v237, %v588
      %590 = vmatmul.bf16.gmra.mxu0 %v460
      %v591 = vpop.f32.mrf.mxu0
      %v592 = vadd.f32 %v237, %v591
      %v593 = vpop.f32.mrf.mxu0
      %v594 = vadd.f32 %v237, %v593
      %595 = vmatmul.bf16.gmra.mxu0 %v463
      %v596 = vpop.f32.mrf.mxu0
      %v597 = vadd.f32 %v237, %v596
      %v598 = vpop.f32.mrf.mxu0
      %v599 = vadd.f32 %v237, %v598
      %600 = vmatmul.bf16.gmra.mxu0 %v466
      %v601 = vpop.f32.mrf.mxu0
      %v602 = vadd.f32 %v237, %v601
      %v603 = vpop.f32.mrf.mxu0
      %v604 = vadd.f32 %v237, %v603
      %605 = vmatmul.bf16.gmra.mxu0 %v469
      %v606 = vpop.f32.mrf.mxu0
      %v607 = vadd.f32 %v237, %v606
      %v608 = vpop.f32.mrf.mxu0
      %609 = vdwg.mxu0
      %v610 = vmax.f32 %v487, 0.0
      %v611 = vmax.f32 %v489, 0.0
      %v612 = vmax.f32 %v492, 0.0
      %v613 = vmax.f32 %v494, 0.0
      %v614 = vmax.f32 %v497, 0.0
      %v615 = vmax.f32 %v499, 0.0
      %v616 = vmax.f32 %v502, 0.0
      %v617 = vmax.f32 %v504, 0.0
      %v618 = vmax.f32 %v507, 0.0
      %v619 = vmax.f32 %v509, 0.0
      %v620 = vmax.f32 %v512, 0.0
      %v621 = vmax.f32 %v514, 0.0
      %v622 = vmax.f32 %v517, 0.0
      %v623 = vmax.f32 %v519, 0.0
      %v624 = vmax.f32 %v522, 0.0
      %v625 = vmax.f32 %v524, 0.0
      %v626 = vmax.f32 %v527, 0.0
      %v627 = vmax.f32 %v529, 0.0
      %v628 = vmax.f32 %v532, 0.0
      %v629 = vmax.f32 %v534, 0.0
      %v630 = vmax.f32 %v537, 0.0
      %v631 = vmax.f32 %v539, 0.0
      %v632 = vmax.f32 %v542, 0.0
      %v633 = vmax.f32 %v544, 0.0
      %v634 = vmax.f32 %v547, 0.0
      %v635 = vmax.f32 %v549, 0.0
      %v636 = vmax.f32 %v552, 0.0
      %v637 = vmax.f32 %v554, 0.0
      %v638 = vmax.f32 %v557, 0.0
      %v639 = vmax.f32 %v559, 0.0
      %v640 = vmax.f32 %v562, 0.0
      %v641 = vmax.f32 %v564, 0.0
      %v642 = vmax.f32 %v567, 0.0
      %v643 = vmax.f32 %v569, 0.0
      %v644 = vmax.f32 %v572, 0.0
      %v645 = vmax.f32 %v574, 0.0
      %v646 = vmax.f32 %v577, 0.0
      %v647 = vmax.f32 %v579, 0.0
      %v648 = vmax.f32 %v582, 0.0
      %v649 = vmax.f32 %v584, 0.0
      %v650 = vmax.f32 %v587, 0.0
      %v651 = vmax.f32 %v589, 0.0
      %v652 = vmax.f32 %v592, 0.0
      %v653 = vmax.f32 %v594, 0.0
      %v654 = vmax.f32 %v597, 0.0
      %v655 = vmax.f32 %v599, 0.0
      %v656 = vmax.f32 %v602, 0.0
      %v657 = vmax.f32 %v604, 0.0
      %v658 = vmax.f32 %v607, 0.0
      %v659 = vpack.c.bf16 %v610, %v610
      %v660 = vpack.c.bf16 %v611, %v611
      %v661 = vpack.c.bf16 %v612, %v612
      %v662 = vpack.c.bf16 %v613, %v613
      %v663 = vpack.c.bf16 %v614, %v614
      %v664 = vpack.c.bf16 %v615, %v615
      %v665 = vpack.c.bf16 %v616, %v616
      %v666 = vpack.c.bf16 %v617, %v617
      %v667 = vpack.c.bf16 %v618, %v618
      %v668 = vpack.c.bf16 %v619, %v619
      %v669 = vpack.c.bf16 %v620, %v620
      %v670 = vpack.c.bf16 %v621, %v621
      %v671 = vpack.c.bf16 %v622, %v622
      %v672 = vpack.c.bf16 %v623, %v623
      %v673 = vpack.c.bf16 %v624, %v624
      %v674 = vpack.c.bf16 %v625, %v625
      %v675 = vpack.c.bf16 %v626, %v626
      %v676 = vpack.c.bf16 %v627, %v627
      %v677 = vpack.c.bf16 %v628, %v628
      %v678 = vpack.c.bf16 %v629, %v629
      %v679 = vpack.c.bf16 %v630, %v630
      %v680 = vpack.c.bf16 %v631, %v631
      %v681 = vpack.c.bf16 %v632, %v632
      %v682 = vpack.c.bf16 %v633, %v633
      %v683 = vpack.c.bf16 %v634, %v634
      %v684 = vpack.c.bf16 %v635, %v635
      %v685 = vpack.c.bf16 %v636, %v636
      %v686 = vpack.c.bf16 %v637, %v637
      %v687 = vpack.c.bf16 %v638, %v638
      %v688 = vpack.c.bf16 %v639, %v639
      %v689 = vpack.c.bf16 %v640, %v640
      %v690 = vpack.c.bf16 %v641, %v641
      %v691 = vpack.c.bf16 %v642, %v642
      %v692 = vpack.c.bf16 %v643, %v643
      %v693 = vpack.c.bf16 %v644, %v644
      %v694 = vpack.c.bf16 %v645, %v645
      %v695 = vpack.c.bf16 %v646, %v646
      %v696 = vpack.c.bf16 %v647, %v647
      %v697 = vpack.c.bf16 %v648, %v648
      %v698 = vpack.c.bf16 %v649, %v649
      %v699 = vpack.c.bf16 %v650, %v650
      %v700 = vpack.c.bf16 %v651, %v651
      %v701 = vpack.c.bf16 %v652, %v652
      %v702 = vpack.c.bf16 %v653, %v653
      %v703 = vpack.c.bf16 %v654, %v654
      %v704 = vpack.c.bf16 %v655, %v655
      %v705 = vpack.c.bf16 %v656, %v656
      %v706 = vpack.c.bf16 %v657, %v657
      %v707 = vpack.c.bf16 %v658, %v658
      %vm708 = vcmask 27648
      %709 = vst.msk [vmem:[%s172] sm:$0xf] %vm708, %v659
      %710 = vst.msk [vmem:[%s172 + $0x4] sm:$0xf] %vm708, %v660
      %711 = vst.msk [vmem:[%s172 + $0x8] sm:$0xf] %vm708, %v661
      %712 = vst.msk [vmem:[%s172 + $0xc] sm:$0xf] %vm708, %v662
      %713 = vst.msk [vmem:[%s172 + $0x10] sm:$0xf] %vm708, %v663
      %714 = vst.msk [vmem:[%s172 + $0x14] sm:$0xf] %vm708, %v664
      %715 = vst.msk [vmem:[%s172 + $0x18] sm:$0xf] %vm708, %v665
      %716 = vst.msk [vmem:[%s172 + $0x1c] sm:$0xf] %vm708, %v666
      %717 = vst.msk [vmem:[%s172 + $0x20] sm:$0xf] %vm708, %v667
      %718 = vst.msk [vmem:[%s172 + $0x24] sm:$0xf] %vm708, %v668
      %719 = vst.msk [vmem:[%s172 + $0x28] sm:$0xf] %vm708, %v669
      %720 = vst.msk [vmem:[%s172 + $0x2c] sm:$0xf] %vm708, %v670
      %721 = vst.msk [vmem:[%s172 + $0x30] sm:$0xf] %vm708, %v671
      %722 = vst.msk [vmem:[%s172 + $0x34] sm:$0xf] %vm708, %v672
      %723 = vst.msk [vmem:[%s172 + $0x38] sm:$0xf] %vm708, %v673
      %724 = vst.msk [vmem:[%s172 + $0x3c] sm:$0xf] %vm708, %v674
      %725 = vst.msk [vmem:[%s172 + $0x40] sm:$0xf] %vm708, %v675
      %726 = vst.msk [vmem:[%s172 + $0x44] sm:$0xf] %vm708, %v676
      %727 = vst.msk [vmem:[%s172 + $0x48] sm:$0xf] %vm708, %v677
      %728 = vst.msk [vmem:[%s172 + $0x4c] sm:$0xf] %vm708, %v678
      %729 = vst.msk [vmem:[%s172 + $0x50] sm:$0xf] %vm708, %v679
      %730 = vst.msk [vmem:[%s172 + $0x54] sm:$0xf] %vm708, %v680
      %731 = vst.msk [vmem:[%s172 + $0x58] sm:$0xf] %vm708, %v681
      %732 = vst.msk [vmem:[%s172 + $0x5c] sm:$0xf] %vm708, %v682
      %733 = vst.msk [vmem:[%s172 + $0x60] sm:$0xf] %vm708, %v683
      %734 = vst.msk [vmem:[%s172 + $0x64] sm:$0xf] %vm708, %v684
      %735 = vst.msk [vmem:[%s172 + $0x68] sm:$0xf] %vm708, %v685
      %736 = vst.msk [vmem:[%s172 + $0x6c] sm:$0xf] %vm708, %v686
      %737 = vst.msk [vmem:[%s172 + $0x70] sm:$0xf] %vm708, %v687
      %738 = vst.msk [vmem:[%s172 + $0x74] sm:$0xf] %vm708, %v688
      %739 = vst.msk [vmem:[%s172 + $0x78] sm:$0xf] %vm708, %v689
      %740 = vst.msk [vmem:[%s172 + $0x7c] sm:$0xf] %vm708, %v690
      %741 = vst.msk [vmem:[%s172 + $0x80] sm:$0xf] %vm708, %v691
      %742 = vst.msk [vmem:[%s172 + $0x84] sm:$0xf] %vm708, %v692
      %743 = vst.msk [vmem:[%s172 + $0x88] sm:$0xf] %vm708, %v693
      %744 = vst.msk [vmem:[%s172 + $0x8c] sm:$0xf] %vm708, %v694
      %745 = vst.msk [vmem:[%s172 + $0x90] sm:$0xf] %vm708, %v695
      %746 = vst.msk [vmem:[%s172 + $0x94] sm:$0xf] %vm708, %v696
      %747 = vst.msk [vmem:[%s172 + $0x98] sm:$0xf] %vm708, %v697
      %748 = vst.msk [vmem:[%s172 + $0x9c] sm:$0xf] %vm708, %v698
      %749 = vst.msk [vmem:[%s172 + $0xa0] sm:$0xf] %vm708, %v699
      %750 = vst.msk [vmem:[%s172 + $0xa4] sm:$0xf] %vm708, %v700
      %751 = vst.msk [vmem:[%s172 + $0xa8] sm:$0xf] %vm708, %v701
      %752 = vst.msk [vmem:[%s172 + $0xac] sm:$0xf] %vm708, %v702
      %753 = vst.msk [vmem:[%s172 + $0xb0] sm:$0xf] %vm708, %v703
      %754 = vst.msk [vmem:[%s172 + $0xb4] sm:$0xf] %vm708, %v704
      %755 = vst.msk [vmem:[%s172 + $0xb8] sm:$0xf] %vm708, %v705
      %756 = vst.msk [vmem:[%s172 + $0xbc] sm:$0xf] %vm708, %v706
      %757 = vst.msk [vmem:[%s172 + $0xc0] sm:$0xf] %vm708, %v707
      %s758 = smul.u32 49, %s14
      %p759 = scmp.lt.s32.totalorder %s758, 146
      %s760 = scalar_select %p759, %s758, 146
      %s761 = smul.addr %s760, 4
      %s762 = scalar_lea.vmem %s3, %s761
      // Predicated region
      $region33: #{c3d_forward.4} parent=31 // pred_check
        %p763 = pneg %p100
      $region34: #{c3d_forward.4} parent=31 // pred_check_branch
        %765 = sbr.rel (%p763) target = $region36
      $region35: #{c3d_forward.4} parent=31 // pred_region
        %s766 = smul.u32 49, %s14
      $region36: #{c3d_forward.4} parent=31 // pred_fallthru
        _
    $region32: #{c3d_forward.4} parent=5 // pred_fallthru
      _
    %p767 = scmp.le.s32.totalorder 2, %s9
    // Predicated region
    $region37: #{c3d_forward.4} parent=5 // pred_check
      %p768 = pneg %p767
    $region38: #{c3d_forward.4} parent=5 // pred_check_branch
      %770 = sbr.rel (%p768) target = $region40
    $region39: #{c3d_forward.4} parent=5 // pred_region
      %s771 = ssub.s32 %s9, 2
      // Predicated region
      $region41: #{c3d_forward.4} parent=39 // pred_check
        %p772 = pneg %p106
      $region42: #{c3d_forward.4} parent=39 // pred_check_branch
        %774 = sbr.rel (%p772) target = $region44
      $region43: #{c3d_forward.4} parent=39 // pred_region
        %s775 = smul.u32 49, %s15
        %p776 = scmp.lt.s32.totalorder %s775, 146
        %s777 = scalar_select %p776, %s775, 146
        %s778 = smul.addr %s777, 4
        %s779 = scalar_lea.vmem %s3, %s778
      $region44: #{c3d_forward.4} parent=39 // pred_fallthru
        _
    $region40: #{c3d_forward.4} parent=5 // pred_fallthru
      _
  $region6: #{c3d_forward.4} parent=0 // loop_footer
    %s13 = sadd.s32 1, %s9
  $region7: #{c3d_forward.4} parent=0 // loop_footer_branch
    %8 = sbr.rel target = $region3
  $region8: #{c3d_forward.4} parent=0 // loop_exit
    _

// kernel: c3d_forward.5
$region0: #{c3d_forward.5}
  #allocation0 [shape = 'u32[]', space=smem, size = 0x4, offset = 0x4, fixed_abs, tag = 'smem constant byte address 0x4 - core index']
  #allocation1 [shape = 'u32[72,128]{1,0:T(1,128)}', space=vmem, size = 0x9000, scoped, tag = 'internal scratch']
  %s0 = inlined_call_operand.vmem [shape: bf16[288,108], index: 0, kind: input, shape index: {}]
  %s1 = inlined_call_operand.vmem [shape: bf16[108,6], index: 1, kind: input, shape index: {}]
  %s2 = inlined_call_operand.vmem [shape: f32[1,6], index: 2, kind: input, shape index: {}]
  %s3 = inlined_call_operand.vmem [shape: bf16[288,6], index: 3, kind: output, shape index: {}]
  %s4 = sld [smem:[#allocation0]]
  $region45: #{c3d_forward.5} parent=0
    _
  %s6 = ssub.s32 1, %s4
  %s7 = scalar_select 0, %s6, %s4
  loop: start=0, step=1, limit=4
  $region2: #{c3d_forward.5} parent=0 // loop_pre_header
    _
  $region3: #{c3d_forward.5} parent=0 // loop_header
    %s9 = sphi 0, %s13
    %p10 = scmp.ge.s32.totalorder %s9, 4
    %s19 = sphi 0, %s21
    %s22 = sphi 0, %s19
    %s23 = sphi 0, %s22
    %s39 = sphi 0, %s23
    %s43 = sphi 0, %s43
    %s45 = sphi 0, %s43
    %s46 = sphi 0, %s45
    %s60 = sphi 0, %s46
    %s64 = sphi 0, %s64
    %s66 = sphi 0, %s64
    %s67 = sphi 0, %s66
    %s81 = sphi 0, %s67
    %s87 = sphi 0, %s89
    %s90 = sphi 0, %s87
    %s91 = sphi 0, %s90
    %s107 = sphi 0, %s91
  $region4: #{c3d_forward.5} parent=0 // loop_header_branch
    %12 = sbr.rel (%p10) target = $region8
  $region5: #{c3d_forward.5} parent=0 // loop_body
    %s14 = ssub.s32 %s9, 1
    %s15 = ssub.s32 %s9, 2
    %s16 = sadd.s32 %s9, 1
    %s17 = ssub.s32 %s9, %s16
    %p18 = scmp.eq.s32.totalorder %s17, 0
    %s20 = sadd.s32 %s19, 1
    %s21 = scalar_select %p18, %s19, %s20
    %p24 = pneg %p18
    %p25 = scmp.eq.s32.totalorder %s9, 1
    %p26 = por %p24, %p25
    %p27 = scmp.ne.s32.totalorder %s19, %s22
    %p28 = scmp.eq.s32.totalorder %s9, 0
    %p29 = por %p27, %p28
    %p30 = scmp.ne.s32.totalorder %s19, %s22
    %p31 = scmp.eq.s32.totalorder %s14, 1
    %p32 = por %p30, %p31
    %p33 = scmp.ne.s32.totalorder %s22, %s23
    %p34 = scmp.eq.s32.totalorder %s14, 0
    %p35 = por %p33, %p34
    %p36 = scmp.ne.s32.totalorder %s22, %s23
    %p37 = scmp.eq.s32.totalorder %s15, 1
    %p38 = por %p36, %p37
    %p40 = scmp.ne.s32.totalorder %s23, %s39
    %p41 = scmp.eq.s32.totalorder %s15, 0
    %p42 = por %p40, %p41
    %s44 = sadd.s32 %s43, 1
    %p47 = scmp.eq.s32.totalorder %s9, 1
    %p48 = scmp.ne.s32.totalorder %s43, %s45
    %p49 = scmp.eq.s32.totalorder %s9, 0
    %p50 = por %p48, %p49
    %p51 = scmp.ne.s32.totalorder %s43, %s45
    %p52 = scmp.eq.s32.totalorder %s14, 1
    %p53 = por %p51, %p52
    %p54 = scmp.ne.s32.totalorder %s45, %s46
    %p55 = scmp.eq.s32.totalorder %s14, 0
    %p56 = por %p54, %p55
    %p57 = scmp.ne.s32.totalorder %s45, %s46
    %p58 = scmp.eq.s32.totalorder %s15, 1
    %p59 = por %p57, %p58
    %p61 = scmp.ne.s32.totalorder %s46, %s60
    %p62 = scmp.eq.s32.totalorder %s15, 0
    %p63 = por %p61, %p62
    %s65 = sadd.s32 %s64, 1
    %p68 = scmp.eq.s32.totalorder %s9, 1
    %p69 = scmp.ne.s32.totalorder %s64, %s66
    %p70 = scmp.eq.s32.totalorder %s9, 0
    %p71 = por %p69, %p70
    %p72 = scmp.ne.s32.totalorder %s64, %s66
    %p73 = scmp.eq.s32.totalorder %s14, 1
    %p74 = por %p72, %p73
    %p75 = scmp.ne.s32.totalorder %s66, %s67
    %p76 = scmp.eq.s32.totalorder %s14, 0
    %p77 = por %p75, %p76
    %p78 = scmp.ne.s32.totalorder %s66, %s67
    %p79 = scmp.eq.s32.totalorder %s15, 1
    %p80 = por %p78, %p79
    %p82 = scmp.ne.s32.totalorder %s67, %s81
    %p83 = scmp.eq.s32.totalorder %s15, 0
    %p84 = por %p82, %p83
    %s85 = ssub.s32 %s9, %s16
    %p86 = scmp.eq.s32.totalorder %s85, 0
    %s88 = sadd.s32 %s87, 1
    %s89 = scalar_select %p86, %s87, %s88
    %p92 = pneg %p86
    %p93 = scmp.eq.s32.totalorder %s9, 1
    %p94 = por %p92, %p93
    %p95 = scmp.ne.s32.totalorder %s87, %s90
    %p96 = scmp.eq.s32.totalorder %s9, 0
    %p97 = por %p95, %p96
    %p98 = scmp.ne.s32.totalorder %s87, %s90
    %p99 = scmp.eq.s32.totalorder %s14, 1
    %p100 = por %p98, %p99
    %p101 = scmp.ne.s32.totalorder %s90, %s91
    %p102 = scmp.eq.s32.totalorder %s14, 0
    %p103 = por %p101, %p102
    %p104 = scmp.ne.s32.totalorder %s90, %s91
    %p105 = scmp.eq.s32.totalorder %s15, 1
    %p106 = por %p104, %p105
    %p108 = scmp.ne.s32.totalorder %s91, %s107
    %p109 = scmp.eq.s32.totalorder %s15, 0
    %p110 = por %p108, %p109
    %p111 = scmp.le.s32.totalorder 1, %s9
    %p112 = scmp.lt.s32.totalorder %s9, 3
    %p113 = pnand %p111, %p112
    %p114 = pneg %p113
    // Predicated region
    $region9: #{c3d_forward.5} parent=5 // pred_check
      _
    $region10: #{c3d_forward.5} parent=5 // pred_check_branch
      %116 = sbr.rel (%p113) target = $region12
    $region11: #{c3d_forward.5} parent=5 // pred_region
      %s117 = ssub.s32 %s9, 1
      // Predicated region
      $region13: #{c3d_forward.5} parent=11 // pred_check
        %p118 = pneg %p56
      $region14: #{c3d_forward.5} parent=11 // pred_check_branch
        %120 = sbr.rel (%p118) target = $region16
      $region15: #{c3d_forward.5} parent=11 // pred_region
        _
      $region16: #{c3d_forward.5} parent=11 // pred_fallthru
        _
      // Predicated region
      $region17: #{c3d_forward.5} parent=11 // pred_check
        %p121 = pneg %p77
      $region18: #{c3d_forward.5} parent=11 // pred_check_branch
        %123 = sbr.rel (%p121) target = $region20
      $region19: #{c3d_forward.5} parent=11 // pred_region
        _
      $region20: #{c3d_forward.5} parent=11 // pred_fallthru
        _
    $region12: #{c3d_forward.5} parent=5 // pred_fallthru
      _
    %p124 = scmp.lt.s32.totalorder %s9, 2
    // Predicated region
    $region21: #{c3d_forward.5} parent=5 // pred_check
      %p125 = pneg %p124
    $region22: #{c3d_forward.5} parent=5 // pred_check_branch
      %127 = sbr.rel (%p125) target = $region24
    $region23: #{c3d_forward.5} parent=5 // pred_region
      // Predicated region
      $region25: #{c3d_forward.5} parent=23 // pred_check
        %p128 = pneg %p29
      $region26: #{c3d_forward.5} parent=23 // pred_check_branch
        %130 = sbr.rel (%p128) target = $region28
      $region27: #{c3d_forward.5} parent=23 // pred_region
        %s131 = smul.u32 18, %s9
        %p132 = scmp.lt.s32.totalorder %s131, 35
        %s133 = scalar_select %p132, %s131, 35
        %s134 = smul.addr %s133, 4
        %s135 = scalar_lea.vmem %s0, %s134
        %s136 = smul.u32 18, %s9
      $region28: #{c3d_forward.5} parent=23 // pred_fallthru
        _
    $region24: #{c3d_forward.5} parent=5 // pred_fallthru
      _
    %p137 = scmp.le.s32.totalorder 1, %s9
    %p138 = scmp.lt.s32.totalorder %s9, 3
    %p139 = pnand %p137, %p138
    %p140 = pneg %p139
    // Predicated region
    $region29: #{c3d_forward.5} parent=5 // pred_check
      _
    $region30: #{c3d_forward.5} parent=5 // pred_check_branch
      %142 = sbr.rel (%p139) target = $region32
    $region31: #{c3d_forward.5} parent=5 // pred_region
      %s143 = ssub.s32 %s9, 1
      %s144 = smul.u32 18, %s14
      %p145 = scmp.lt.s32.totalorder %s144, 35
      %s146 = scalar_select %p145, %s144, 35
      %s147 = smul.addr %s146, 4
      %s148 = scalar_lea.vmem %s0, %s147
      %p149 = pneg %p35
      %p150 = pneg %p32
      %p151 = pneg %p56
      %p152 = pneg %p53
      %p153 = pneg %p77
      %p154 = pneg %p74
      %p155 = pneg %p103
      %p156 = pneg %p100
      %s157 = smul.u32 18, %s14
      %p158 = scmp.lt.s32.totalorder %s157, 35
      %s159 = scalar_select %p158, %s157, 35
      %s160 = smul.addr %s159, 4
      %s161 = scalar_lea.vmem %s3, %s160
      %s162 = smul.u32 18, %s14
      %p163 = scmp.lt.s32.totalorder %s162, 35
      %s164 = scalar_select %p163, %s162, 35
      %s165 = smul.addr %s164, 4
      %s166 = scalar_lea.vmem %s0, %s165
      %s167 = smul.u32 18, %s14
      %s168 = smul.u32 18, %s14
      %p169 = scmp.lt.s32.totalorder %s168, 35
      %s170 = scalar_select %p169, %s168, 35
      %s171 = smul.addr %s170, 4
      %s172 = scalar_lea.vmem %s3, %s171
      %s173 = smul.u32 18, %s14
      %v175 = vld [vmem:[%s166] sm:$0xf]
      %v176 = vld [vmem:[%s166 + $0x4] sm:$0xf]
      %v177 = vld [vmem:[%s166 + $0x8] sm:$0xf]
      %v178 = vld [vmem:[%s166 + $0xc] sm:$0xf]
      %v179 = vld [vmem:[%s166 + $0x10] sm:$0xf]
      %v180 = vld [vmem:[%s166 + $0x14] sm:$0xf]
      %v181 = vld [vmem:[%s166 + $0x18] sm:$0xf]
      %v182 = vld [vmem:[%s166 + $0x1c] sm:$0xf]
      %v183 = vld [vmem:[%s166 + $0x20] sm:$0xf]
      %v184 = vld [vmem:[%s166 + $0x24] sm:$0xf]
      %v185 = vld [vmem:[%s166 + $0x28] sm:$0xf]
      %v186 = vld [vmem:[%s166 + $0x2c] sm:$0xf]
      %v187 = vld [vmem:[%s166 + $0x30] sm:$0xf]
      %v188 = vld [vmem:[%s166 + $0x34] sm:$0xf]
      %v189 = vld [vmem:[%s166 + $0x38] sm:$0xf]
      %v190 = vld [vmem:[%s166 + $0x3c] sm:$0xf]
      %v191 = vld [vmem:[%s166 + $0x40] sm:$0xf]
      %v192 = vld [vmem:[%s166 + $0x44] sm:$0xf]
      %v193 = vld [vmem:[%s1] sm:$0xf]
      %v194 = vld [vmem:[%s1 + $0x4] sm:$0xf]
      %v195 = vld [vmem:[%s1 + $0x8] sm:$0xf]
      %v196 = vld [vmem:[%s1 + $0xc] sm:$0xf]
      %v197 = vld [vmem:[%s1 + $0x10] sm:$0xf]
      %v198 = vld [vmem:[%s1 + $0x14] sm:$0xf]
      %v199 = vld [vmem:[%s1 + $0x18] sm:$0xf]
      %v200 = vld [vmem:[%s1 + $0x1c] sm:$0xf]
      %v201 = vld [vmem:[%s1 + $0x20] sm:$0xf]
      %v202 = vld [vmem:[%s1 + $0x24] sm:$0xf]
      %v203 = vld [vmem:[%s1 + $0x28] sm:$0xf]
      %v204 = vld [vmem:[%s1 + $0x2c] sm:$0xf]
      %v205 = vld [vmem:[%s1 + $0x30] sm:$0xf]
      %v206 = vld [vmem:[%s1 + $0x34] sm:$0x3]
      %v207 = vld [vmem:[%s2] sm:$0x1]
      %v209 = vperm.slane %v207, 0
      %v229 = vunpack.c.l.b16 %v175
      %v230 = vunpack.c.l.b16 %v176
      %v231 = vunpack.c.l.b16 %v177
      %v232 = vunpack.c.l.b16 %v178
      %v233 = vunpack.c.l.b16 %v179
      %v234 = vunpack.c.l.b16 %v180
      %v235 = vunpack.c.l.b16 %v181
      %v236 = vunpack.c.l.b16 %v182
      %v237 = vunpack.c.l.b16 %v183
      %v238 = vunpack.c.l.b16 %v184
      %v239 = vunpack.c.l.b16 %v185
      %v240 = vunpack.c.l.b16 %v186
      %v241 = vunpack.c.l.b16 %v187
      %v242 = vunpack.c.l.b16 %v188
      %v243 = vunpack.c.l.b16 %v189
      %v244 = vunpack.c.l.b16 %v190
      %v245 = vunpack.c.l.b16 %v191
      %v246 = vunpack.c.l.b16 %v192
      %v247 = vpack.c.b16 %v230, %v229
      %v248 = vpack.c.b16 %v232, %v231
      %v249 = vpack.c.b16 %v234, %v233
      %v250 = vpack.c.b16 %v236, %v235
      %v251 = vpack.c.b16 %v238, %v237
      %v252 = vpack.c.b16 %v240, %v239
      %v253 = vpack.c.b16 %v242, %v241
      %v254 = vpack.c.b16 %v244, %v243
      %v255 = vpack.c.b16 %v246, %v245
      %v270 = vunpack.c.l.b16 %v193
      %v271 = vunpack.c.l.b16 %v194
      %v272 = vunpack.c.l.b16 %v195
      %v273 = vunpack.c.l.b16 %v196
      %v274 = vunpack.c.l.b16 %v197
      %v275 = vunpack.c.l.b16 %v198
      %v276 = vunpack.c.l.b16 %v199
      %v277 = vunpack.c.l.b16 %v200
      %v278 = vunpack.c.l.b16 %v201
      %v279 = vunpack.c.l.b16 %v202
      %v280 = vunpack.c.l.b16 %v203
      %v281 = vunpack.c.l.b16 %v204
      %v282 = vunpack.c.l.b16 %v205
      %v283 = vunpack.c.l.b16 %v206
      %v284 = vpack.c.b16 %v271, %v270
      %v285 = vpack.c.b16 %v273, %v272
      %v286 = vpack.c.b16 %v275, %v274
      %v287 = vpack.c.b16 %v277, %v276
      %v288 = vpack.c.b16 %v279, %v278
      %v289 = vpack.c.b16 %v281, %v280
      %v290 = vpack.c.b16 %v283, %v282
      %vm297 = vcmask 883712
      %v299 = vsel %vm297, %v247, 0
      %v302 = vsel %vm297, %v248, 0
      %v305 = vsel %vm297, %v249, 0
      %v308 = vsel %vm297, %v250, 0
      %v311 = vsel %vm297, %v251, 0
      %v314 = vsel %vm297, %v252, 0
      %v317 = vsel %vm297, %v253, 0
      %v320 = vsel %vm297, %v254, 0
      %v323 = vsel %vm297, %v255, 0
      %vm325 = vcmask 1045504
      %v327 = vsel %vm325, %v290, 0
      %329 = vmatpush.bf16.msra.mxu0 0
      %330 = vmatpush.bf16.msra.mxu0 %v327
      %331 = vmatpush.bf16.msra.mxu0 %v289
      %332 = vmatpush.bf16.msra.mxu0 %v288
      %333 = vmatpush.bf16.msra.mxu0 %v287
      %334 = vmatpush.bf16.msra.mxu0 %v286
      %335 = vmatpush.bf16.msra.mxu0 %v285
      %336 = vmatpush.bf16.msra.mxu0 %v284
      %337 = vmatmul.bf16.gmra.mxu0 %v299
      %v338 = vpop.f32.mrf.mxu0
      %v339 = vadd.f32 %v209, %v338
      %v340 = vpop.f32.mrf.mxu0
      %v341 = vadd.f32 %v209, %v340
      %342 = vmatmul.bf16.gmra.mxu0 %v302
      %v343 = vpop.f32.mrf.mxu0
      %v344 = vadd.f32 %v209, %v343
      %v345 = vpop.f32.mrf.mxu0
      %v346 = vadd.f32 %v209, %v345
      %347 = vmatmul.bf16.gmra.mxu0 %v305
      %v348 = vpop.f32.mrf.mxu0
      %v349 = vadd.f32 %v209, %v348
      %v350 = vpop.f32.mrf.mxu0
      %v351 = vadd.f32 %v209, %v350
      %352 = vmatmul.bf16.gmra.mxu0 %v308
      %v353 = vpop.f32.mrf.mxu0
      %v354 = vadd.f32 %v209, %v353
      %v355 = vpop.f32.mrf.mxu0
      %v356 = vadd.f32 %v209, %v355
      %357 = vmatmul.bf16.gmra.mxu0 %v311
      %v358 = vpop.f32.mrf.mxu0
      %v359 = vadd.f32 %v209, %v358
      %v360 = vpop.f32.mrf.mxu0
      %v361 = vadd.f32 %v209, %v360
      %362 = vmatmul.bf16.gmra.mxu0 %v314
      %v363 = vpop.f32.mrf.mxu0
      %v364 = vadd.f32 %v209, %v363
      %v365 = vpop.f32.mrf.mxu0
      %v366 = vadd.f32 %v209, %v365
      %367 = vmatmul.bf16.gmra.mxu0 %v317
      %v368 = vpop.f32.mrf.mxu0
      %v369 = vadd.f32 %v209, %v368
      %v370 = vpop.f32.mrf.mxu0
      %v371 = vadd.f32 %v209, %v370
      %372 = vmatmul.bf16.gmra.mxu0 %v320
      %v373 = vpop.f32.mrf.mxu0
      %v374 = vadd.f32 %v209, %v373
      %v375 = vpop.f32.mrf.mxu0
      %v376 = vadd.f32 %v209, %v375
      %377 = vmatmul.bf16.gmra.mxu0 %v323
      %v378 = vpop.f32.mrf.mxu0
      %v379 = vadd.f32 %v209, %v378
      %v380 = vpop.f32.mrf.mxu0
      %v381 = vadd.f32 %v209, %v380
      %382 = vdwg.mxu0
      %v383 = vmax.f32 %v339, 0.0
      %v384 = vmax.f32 %v341, 0.0
      %v385 = vmax.f32 %v344, 0.0
      %v386 = vmax.f32 %v346, 0.0
      %v387 = vmax.f32 %v349, 0.0
      %v388 = vmax.f32 %v351, 0.0
      %v389 = vmax.f32 %v354, 0.0
      %v390 = vmax.f32 %v356, 0.0
      %v391 = vmax.f32 %v359, 0.0
      %v392 = vmax.f32 %v361, 0.0
      %v393 = vmax.f32 %v364, 0.0
      %v394 = vmax.f32 %v366, 0.0
      %v395 = vmax.f32 %v369, 0.0
      %v396 = vmax.f32 %v371, 0.0
      %v397 = vmax.f32 %v374, 0.0
      %v398 = vmax.f32 %v376, 0.0
      %v399 = vmax.f32 %v379, 0.0
      %v400 = vmax.f32 %v381, 0.0
      %v401 = vpack.c.bf16 %v383, %v383
      %v402 = vpack.c.bf16 %v384, %v384
      %v403 = vpack.c.bf16 %v385, %v385
      %v404 = vpack.c.bf16 %v386, %v386
      %v405 = vpack.c.bf16 %v387, %v387
      %v406 = vpack.c.bf16 %v388, %v388
      %v407 = vpack.c.bf16 %v389, %v389
      %v408 = vpack.c.bf16 %v390, %v390
      %v409 = vpack.c.bf16 %v391, %v391
      %v410 = vpack.c.bf16 %v392, %v392
      %v411 = vpack.c.bf16 %v393, %v393
      %v412 = vpack.c.bf16 %v394, %v394
      %v413 = vpack.c.bf16 %v395, %v395
      %v414 = vpack.c.bf16 %v396, %v396
      %v415 = vpack.c.bf16 %v397, %v397
      %v416 = vpack.c.bf16 %v398, %v398
      %v417 = vpack.c.bf16 %v399, %v399
      %v418 = vpack.c.bf16 %v400, %v400
      %vm419 = vcmask 44032
      %420 = vst.msk [vmem:[%s172] sm:$0xf] %vm419, %v401
      %421 = vst.msk [vmem:[%s172 + $0x4] sm:$0xf] %vm419, %v402
      %422 = vst.msk [vmem:[%s172 + $0x8] sm:$0xf] %vm419, %v403
      %423 = vst.msk [vmem:[%s172 + $0xc] sm:$0xf] %vm419, %v404
      %424 = vst.msk [vmem:[%s172 + $0x10] sm:$0xf] %vm419, %v405
      %425 = vst.msk [vmem:[%s172 + $0x14] sm:$0xf] %vm419, %v406
      %426 = vst.msk [vmem:[%s172 + $0x18] sm:$0xf] %vm419, %v407
      %427 = vst.msk [vmem:[%s172 + $0x1c] sm:$0xf] %vm419, %v408
      %428 = vst.msk [vmem:[%s172 + $0x20] sm:$0xf] %vm419, %v409
      %429 = vst.msk [vmem:[%s172 + $0x24] sm:$0xf] %vm419, %v410
      %430 = vst.msk [vmem:[%s172 + $0x28] sm:$0xf] %vm419, %v411
      %431 = vst.msk [vmem:[%s172 + $0x2c] sm:$0xf] %vm419, %v412
      %432 = vst.msk [vmem:[%s172 + $0x30] sm:$0xf] %vm419, %v413
      %433 = vst.msk [vmem:[%s172 + $0x34] sm:$0xf] %vm419, %v414
      %434 = vst.msk [vmem:[%s172 + $0x38] sm:$0xf] %vm419, %v415
      %435 = vst.msk [vmem:[%s172 + $0x3c] sm:$0xf] %vm419, %v416
      %436 = vst.msk [vmem:[%s172 + $0x40] sm:$0xf] %vm419, %v417
      %437 = vst.msk [vmem:[%s172 + $0x44] sm:$0xf] %vm419, %v418
      %s438 = smul.u32 18, %s14
      %p439 = scmp.lt.s32.totalorder %s438, 35
      %s440 = scalar_select %p439, %s438, 35
      %s441 = smul.addr %s440, 4
      %s442 = scalar_lea.vmem %s3, %s441
      // Predicated region
      $region33: #{c3d_forward.5} parent=31 // pred_check
        %p443 = pneg %p100
      $region34: #{c3d_forward.5} parent=31 // pred_check_branch
        %445 = sbr.rel (%p443) target = $region36
      $region35: #{c3d_forward.5} parent=31 // pred_region
        %s446 = smul.u32 18, %s14
      $region36: #{c3d_forward.5} parent=31 // pred_fallthru
        _
    $region32: #{c3d_forward.5} parent=5 // pred_fallthru
      _
    %p447 = scmp.le.s32.totalorder 2, %s9
    // Predicated region
    $region37: #{c3d_forward.5} parent=5 // pred_check
      %p448 = pneg %p447
    $region38: #{c3d_forward.5} parent=5 // pred_check_branch
      %450 = sbr.rel (%p448) target = $region40
    $region39: #{c3d_forward.5} parent=5 // pred_region
      %s451 = ssub.s32 %s9, 2
      // Predicated region
      $region41: #{c3d_forward.5} parent=39 // pred_check
        %p452 = pneg %p106
      $region42: #{c3d_forward.5} parent=39 // pred_check_branch
        %454 = sbr.rel (%p452) target = $region44
      $region43: #{c3d_forward.5} parent=39 // pred_region
        %s455 = smul.u32 18, %s15
        %p456 = scmp.lt.s32.totalorder %s455, 35
        %s457 = scalar_select %p456, %s455, 35
        %s458 = smul.addr %s457, 4
        %s459 = scalar_lea.vmem %s3, %s458
      $region44: #{c3d_forward.5} parent=39 // pred_fallthru
        _
    $region40: #{c3d_forward.5} parent=5 // pred_fallthru
      _
  $region6: #{c3d_forward.5} parent=0 // loop_footer
    %s13 = sadd.s32 1, %s9
  $region7: #{c3d_forward.5} parent=0 // loop_footer_branch
    %8 = sbr.rel target = $region3
  $region8: #{c3d_forward.5} parent=0 // loop_exit
    _

// kernel: c3d_forward.6
$region0: #{c3d_forward.6}
  #allocation0 [shape = 'u32[]', space=smem, size = 0x4, offset = 0x4, fixed_abs, tag = 'smem constant byte address 0x4 - core index']
  #allocation1 [shape = 'u32[72,128]{1,0:T(1,128)}', space=vmem, size = 0x9000, scoped, tag = 'internal scratch']
  %s0 = inlined_call_operand.vmem [shape: bf16[48,81], index: 0, kind: input, shape index: {}]
  %s1 = inlined_call_operand.vmem [shape: bf16[81,4], index: 1, kind: input, shape index: {}]
  %s2 = inlined_call_operand.vmem [shape: f32[1,4], index: 2, kind: input, shape index: {}]
  %s3 = inlined_call_operand.vmem [shape: bf16[48,4], index: 3, kind: output, shape index: {}]
  %s4 = sld [smem:[#allocation0]]
  $region45: #{c3d_forward.6} parent=0
    _
  %s6 = ssub.s32 1, %s4
  %s7 = scalar_select 0, %s6, %s4
  loop: start=0, step=1, limit=4
  $region2: #{c3d_forward.6} parent=0 // loop_pre_header
    _
  $region3: #{c3d_forward.6} parent=0 // loop_header
    %s9 = sphi 0, %s13
    %p10 = scmp.ge.s32.totalorder %s9, 4
    %s19 = sphi 0, %s21
    %s22 = sphi 0, %s19
    %s23 = sphi 0, %s22
    %s39 = sphi 0, %s23
    %s43 = sphi 0, %s43
    %s45 = sphi 0, %s43
    %s46 = sphi 0, %s45
    %s60 = sphi 0, %s46
    %s64 = sphi 0, %s64
    %s66 = sphi 0, %s64
    %s67 = sphi 0, %s66
    %s81 = sphi 0, %s67
    %s87 = sphi 0, %s89
    %s90 = sphi 0, %s87
    %s91 = sphi 0, %s90
    %s107 = sphi 0, %s91
  $region4: #{c3d_forward.6} parent=0 // loop_header_branch
    %12 = sbr.rel (%p10) target = $region8
  $region5: #{c3d_forward.6} parent=0 // loop_body
    %s14 = ssub.s32 %s9, 1
    %s15 = ssub.s32 %s9, 2
    %s16 = sadd.s32 %s9, 1
    %s17 = ssub.s32 %s9, %s16
    %p18 = scmp.eq.s32.totalorder %s17, 0
    %s20 = sadd.s32 %s19, 1
    %s21 = scalar_select %p18, %s19, %s20
    %p24 = pneg %p18
    %p25 = scmp.eq.s32.totalorder %s9, 1
    %p26 = por %p24, %p25
    %p27 = scmp.ne.s32.totalorder %s19, %s22
    %p28 = scmp.eq.s32.totalorder %s9, 0
    %p29 = por %p27, %p28
    %p30 = scmp.ne.s32.totalorder %s19, %s22
    %p31 = scmp.eq.s32.totalorder %s14, 1
    %p32 = por %p30, %p31
    %p33 = scmp.ne.s32.totalorder %s22, %s23
    %p34 = scmp.eq.s32.totalorder %s14, 0
    %p35 = por %p33, %p34
    %p36 = scmp.ne.s32.totalorder %s22, %s23
    %p37 = scmp.eq.s32.totalorder %s15, 1
    %p38 = por %p36, %p37
    %p40 = scmp.ne.s32.totalorder %s23, %s39
    %p41 = scmp.eq.s32.totalorder %s15, 0
    %p42 = por %p40, %p41
    %s44 = sadd.s32 %s43, 1
    %p47 = scmp.eq.s32.totalorder %s9, 1
    %p48 = scmp.ne.s32.totalorder %s43, %s45
    %p49 = scmp.eq.s32.totalorder %s9, 0
    %p50 = por %p48, %p49
    %p51 = scmp.ne.s32.totalorder %s43, %s45
    %p52 = scmp.eq.s32.totalorder %s14, 1
    %p53 = por %p51, %p52
    %p54 = scmp.ne.s32.totalorder %s45, %s46
    %p55 = scmp.eq.s32.totalorder %s14, 0
    %p56 = por %p54, %p55
    %p57 = scmp.ne.s32.totalorder %s45, %s46
    %p58 = scmp.eq.s32.totalorder %s15, 1
    %p59 = por %p57, %p58
    %p61 = scmp.ne.s32.totalorder %s46, %s60
    %p62 = scmp.eq.s32.totalorder %s15, 0
    %p63 = por %p61, %p62
    %s65 = sadd.s32 %s64, 1
    %p68 = scmp.eq.s32.totalorder %s9, 1
    %p69 = scmp.ne.s32.totalorder %s64, %s66
    %p70 = scmp.eq.s32.totalorder %s9, 0
    %p71 = por %p69, %p70
    %p72 = scmp.ne.s32.totalorder %s64, %s66
    %p73 = scmp.eq.s32.totalorder %s14, 1
    %p74 = por %p72, %p73
    %p75 = scmp.ne.s32.totalorder %s66, %s67
    %p76 = scmp.eq.s32.totalorder %s14, 0
    %p77 = por %p75, %p76
    %p78 = scmp.ne.s32.totalorder %s66, %s67
    %p79 = scmp.eq.s32.totalorder %s15, 1
    %p80 = por %p78, %p79
    %p82 = scmp.ne.s32.totalorder %s67, %s81
    %p83 = scmp.eq.s32.totalorder %s15, 0
    %p84 = por %p82, %p83
    %s85 = ssub.s32 %s9, %s16
    %p86 = scmp.eq.s32.totalorder %s85, 0
    %s88 = sadd.s32 %s87, 1
    %s89 = scalar_select %p86, %s87, %s88
    %p92 = pneg %p86
    %p93 = scmp.eq.s32.totalorder %s9, 1
    %p94 = por %p92, %p93
    %p95 = scmp.ne.s32.totalorder %s87, %s90
    %p96 = scmp.eq.s32.totalorder %s9, 0
    %p97 = por %p95, %p96
    %p98 = scmp.ne.s32.totalorder %s87, %s90
    %p99 = scmp.eq.s32.totalorder %s14, 1
    %p100 = por %p98, %p99
    %p101 = scmp.ne.s32.totalorder %s90, %s91
    %p102 = scmp.eq.s32.totalorder %s14, 0
    %p103 = por %p101, %p102
    %p104 = scmp.ne.s32.totalorder %s90, %s91
    %p105 = scmp.eq.s32.totalorder %s15, 1
    %p106 = por %p104, %p105
    %p108 = scmp.ne.s32.totalorder %s91, %s107
    %p109 = scmp.eq.s32.totalorder %s15, 0
    %p110 = por %p108, %p109
    %p111 = scmp.le.s32.totalorder 1, %s9
    %p112 = scmp.lt.s32.totalorder %s9, 3
    %p113 = pnand %p111, %p112
    %p114 = pneg %p113
    // Predicated region
    $region9: #{c3d_forward.6} parent=5 // pred_check
      _
    $region10: #{c3d_forward.6} parent=5 // pred_check_branch
      %116 = sbr.rel (%p113) target = $region12
    $region11: #{c3d_forward.6} parent=5 // pred_region
      %s117 = ssub.s32 %s9, 1
      // Predicated region
      $region13: #{c3d_forward.6} parent=11 // pred_check
        %p118 = pneg %p56
      $region14: #{c3d_forward.6} parent=11 // pred_check_branch
        %120 = sbr.rel (%p118) target = $region16
      $region15: #{c3d_forward.6} parent=11 // pred_region
        _
      $region16: #{c3d_forward.6} parent=11 // pred_fallthru
        _
      // Predicated region
      $region17: #{c3d_forward.6} parent=11 // pred_check
        %p121 = pneg %p77
      $region18: #{c3d_forward.6} parent=11 // pred_check_branch
        %123 = sbr.rel (%p121) target = $region20
      $region19: #{c3d_forward.6} parent=11 // pred_region
        _
      $region20: #{c3d_forward.6} parent=11 // pred_fallthru
        _
    $region12: #{c3d_forward.6} parent=5 // pred_fallthru
      _
    %p124 = scmp.lt.s32.totalorder %s9, 2
    // Predicated region
    $region21: #{c3d_forward.6} parent=5 // pred_check
      %p125 = pneg %p124
    $region22: #{c3d_forward.6} parent=5 // pred_check_branch
      %127 = sbr.rel (%p125) target = $region24
    $region23: #{c3d_forward.6} parent=5 // pred_region
      // Predicated region
      $region25: #{c3d_forward.6} parent=23 // pred_check
        %p128 = pneg %p29
      $region26: #{c3d_forward.6} parent=23 // pred_check_branch
        %130 = sbr.rel (%p128) target = $region28
      $region27: #{c3d_forward.6} parent=23 // pred_region
        %s131 = smul.u32 3, %s9
        %p132 = scmp.lt.s32.totalorder %s131, 5
        %s133 = scalar_select %p132, %s131, 5
        %s134 = smul.addr %s133, 4
        %s135 = scalar_lea.vmem %s0, %s134
        %s136 = smul.u32 3, %s9
      $region28: #{c3d_forward.6} parent=23 // pred_fallthru
        _
    $region24: #{c3d_forward.6} parent=5 // pred_fallthru
      _
    %p137 = scmp.le.s32.totalorder 1, %s9
    %p138 = scmp.lt.s32.totalorder %s9, 3
    %p139 = pnand %p137, %p138
    %p140 = pneg %p139
    // Predicated region
    $region29: #{c3d_forward.6} parent=5 // pred_check
      _
    $region30: #{c3d_forward.6} parent=5 // pred_check_branch
      %142 = sbr.rel (%p139) target = $region32
    $region31: #{c3d_forward.6} parent=5 // pred_region
      %s143 = ssub.s32 %s9, 1
      %s144 = smul.u32 3, %s14
      %p145 = scmp.lt.s32.totalorder %s144, 5
      %s146 = scalar_select %p145, %s144, 5
      %s147 = smul.addr %s146, 4
      %s148 = scalar_lea.vmem %s0, %s147
      %p149 = pneg %p35
      %p150 = pneg %p32
      %p151 = pneg %p56
      %p152 = pneg %p53
      %p153 = pneg %p77
      %p154 = pneg %p74
      %p155 = pneg %p103
      %p156 = pneg %p100
      %s157 = smul.u32 3, %s14
      %p158 = scmp.lt.s32.totalorder %s157, 5
      %s159 = scalar_select %p158, %s157, 5
      %s160 = smul.addr %s159, 4
      %s161 = scalar_lea.vmem %s3, %s160
      %s162 = smul.u32 3, %s14
      %p163 = scmp.lt.s32.totalorder %s162, 5
      %s164 = scalar_select %p163, %s162, 5
      %s165 = smul.addr %s164, 4
      %s166 = scalar_lea.vmem %s0, %s165
      %s167 = smul.u32 3, %s14
      %s168 = smul.u32 3, %s14
      %p169 = scmp.lt.s32.totalorder %s168, 5
      %s170 = scalar_select %p169, %s168, 5
      %s171 = smul.addr %s170, 4
      %s172 = scalar_lea.vmem %s3, %s171
      %s173 = smul.u32 3, %s14
      %v175 = vld [vmem:[%s166] sm:$0xf]
      %v176 = vld [vmem:[%s166 + $0x4] sm:$0xf]
      %v177 = vld [vmem:[%s166 + $0x8] sm:$0xf]
      %v178 = vld [vmem:[%s1] sm:$0xf]
      %v179 = vld [vmem:[%s1 + $0x4] sm:$0xf]
      %v180 = vld [vmem:[%s1 + $0x8] sm:$0xf]
      %v181 = vld [vmem:[%s1 + $0xc] sm:$0xf]
      %v182 = vld [vmem:[%s1 + $0x10] sm:$0xf]
      %v183 = vld [vmem:[%s1 + $0x14] sm:$0xf]
      %v184 = vld [vmem:[%s1 + $0x18] sm:$0xf]
      %v185 = vld [vmem:[%s1 + $0x1c] sm:$0xf]
      %v186 = vld [vmem:[%s1 + $0x20] sm:$0xf]
      %v187 = vld [vmem:[%s1 + $0x24] sm:$0xf]
      %v188 = vld [vmem:[%s1 + $0x28] sm:$0x1]
      %v189 = vld [vmem:[%s2] sm:$0x1]
      %v191 = vperm.slane %v189, 0
      %v196 = vunpack.c.l.b16 %v175
      %v197 = vunpack.c.l.b16 %v176
      %v198 = vunpack.c.l.b16 %v177
      %v199 = vpack.c.b16 %v197, %v196
      %v200 = vpack.c.b16 %v198, %v198
      %v212 = vunpack.c.l.b16 %v178
      %v213 = vunpack.c.l.b16 %v179
      %v214 = vunpack.c.l.b16 %v180
      %v215 = vunpack.c.l.b16 %v181
      %v216 = vunpack.c.l.b16 %v182
      %v217 = vunpack.c.l.b16 %v183
      %v218 = vunpack.c.l.b16 %v184
      %v219 = vunpack.c.l.b16 %v185
      %v220 = vunpack.c.l.b16 %v186
      %v221 = vunpack.c.l.b16 %v187
      %v222 = vunpack.c.l.b16 %v188
      %v223 = vpack.c.b16 %v213, %v212
      %v224 = vpack.c.b16 %v215, %v214
      %v225 = vpack.c.b16 %v217, %v216
      %v226 = vpack.c.b16 %v219, %v218
      %v227 = vpack.c.b16 %v221, %v220
      %v228 = vpack.c.b16 %v222, %v222
      %vm234 = vcmask 662528
      %v236 = vsel %vm234, %v199, 0
      %v239 = vsel %vm234, %v200, 0
      %vm241 = vcmask 1040384
      %v242 = vsel 0, 4294967295, 65535
      %v243 = vsel %vm241, %v242, 0
      %v245 = vand.u32 %v228, %v243
      %247 = vmatpush.bf16.msra.mxu0 0
      %248 = vmatpush.bf16.msra.mxu0 0
      %249 = vmatpush.bf16.msra.mxu0 %v245
      %250 = vmatpush.bf16.msra.mxu0 %v227
      %251 = vmatpush.bf16.msra.mxu0 %v226
      %252 = vmatpush.bf16.msra.mxu0 %v225
      %253 = vmatpush.bf16.msra.mxu0 %v224
      %254 = vmatpush.bf16.msra.mxu0 %v223
      %255 = vmatmul.bf16.gmra.mxu0 %v236
      %v256 = vpop.f32.mrf.mxu0
      %v257 = vadd.f32 %v191, %v256
      %v258 = vpop.f32.mrf.mxu0
      %v259 = vadd.f32 %v191, %v258
      %260 = vmatmul.bf16.gmra.mxu0 %v239
      %v261 = vpop.f32.mrf.mxu0
      %v262 = vadd.f32 %v191, %v261
      %v263 = vpop.f32.mrf.mxu0
      %264 = vdwg.mxu0
      %v265 = vmax.f32 %v257, 0.0
      %v266 = vmax.f32 %v259, 0.0
      %v267 = vmax.f32 %v262, 0.0
      %v268 = vpack.c.bf16 %v265, %v265
      %v269 = vpack.c.bf16 %v266, %v266
      %v270 = vpack.c.bf16 %v267, %v267
      %vm271 = vcmask 27648
      %272 = vst.msk [vmem:[%s172] sm:$0xf] %vm271, %v268
      %273 = vst.msk [vmem:[%s172 + $0x4] sm:$0xf] %vm271, %v269
      %274 = vst.msk [vmem:[%s172 + $0x8] sm:$0xf] %vm271, %v270
      %s275 = smul.u32 3, %s14
      %p276 = scmp.lt.s32.totalorder %s275, 5
      %s277 = scalar_select %p276, %s275, 5
      %s278 = smul.addr %s277, 4
      %s279 = scalar_lea.vmem %s3, %s278
      // Predicated region
      $region33: #{c3d_forward.6} parent=31 // pred_check
        %p280 = pneg %p100
      $region34: #{c3d_forward.6} parent=31 // pred_check_branch
        %282 = sbr.rel (%p280) target = $region36
      $region35: #{c3d_forward.6} parent=31 // pred_region
        %s283 = smul.u32 3, %s14
      $region36: #{c3d_forward.6} parent=31 // pred_fallthru
        _
    $region32: #{c3d_forward.6} parent=5 // pred_fallthru
      _
    %p284 = scmp.le.s32.totalorder 2, %s9
    // Predicated region
    $region37: #{c3d_forward.6} parent=5 // pred_check
      %p285 = pneg %p284
    $region38: #{c3d_forward.6} parent=5 // pred_check_branch
      %287 = sbr.rel (%p285) target = $region40
    $region39: #{c3d_forward.6} parent=5 // pred_region
      %s288 = ssub.s32 %s9, 2
      // Predicated region
      $region41: #{c3d_forward.6} parent=39 // pred_check
        %p289 = pneg %p106
      $region42: #{c3d_forward.6} parent=39 // pred_check_branch
        %291 = sbr.rel (%p289) target = $region44
      $region43: #{c3d_forward.6} parent=39 // pred_region
        %s292 = smul.u32 3, %s15
        %p293 = scmp.lt.s32.totalorder %s292, 5
        %s294 = scalar_select %p293, %s292, 5
        %s295 = smul.addr %s294, 4
        %s296 = scalar_lea.vmem %s3, %s295
      $region44: #{c3d_forward.6} parent=39 // pred_fallthru
        _
    $region40: #{c3d_forward.6} parent=5 // pred_fallthru
      _
  $region6: #{c3d_forward.6} parent=0 // loop_footer
    %s13 = sadd.s32 1, %s9
  $region7: #{c3d_forward.6} parent=0 // loop_footer_branch
    %8 = sbr.rel target = $region3
  $region8: #{c3d_forward.6} parent=0 // loop_exit
    _

// kernel: c3d_forward.7
$region0: #{c3d_forward.7}
  #allocation0 [shape = 'u32[]', space=smem, size = 0x4, offset = 0x4, fixed_abs, tag = 'smem constant byte address 0x4 - core index']
  #allocation1 [shape = 'u32[72,128]{1,0:T(1,128)}', space=vmem, size = 0x9000, scoped, tag = 'internal scratch']
  %s0 = inlined_call_operand.vmem [shape: bf16[2,864], index: 0, kind: input, shape index: {}]
  %s1 = inlined_call_operand.vmem [shape: bf16[2,96], index: 1, kind: input, shape index: {}]
  %s2 = inlined_call_operand.vmem [shape: bf16[864,32], index: 2, kind: input, shape index: {}]
  %s3 = inlined_call_operand.vmem [shape: f32[1,32], index: 3, kind: input, shape index: {}]
  %s4 = inlined_call_operand.vmem [shape: bf16[96,16], index: 4, kind: input, shape index: {}]
  %s5 = inlined_call_operand.vmem [shape: f32[1,16], index: 5, kind: input, shape index: {}]
  %s6 = inlined_call_operand.vmem [shape: bf16[32,32], index: 6, kind: input, shape index: {}]
  %s7 = inlined_call_operand.vmem [shape: bf16[16,32], index: 7, kind: input, shape index: {}]
  %s8 = inlined_call_operand.vmem [shape: f32[1,32], index: 8, kind: input, shape index: {}]
  %s9 = inlined_call_operand.vmem [shape: bf16[32,3], index: 9, kind: input, shape index: {}]
  %s10 = inlined_call_operand.vmem [shape: f32[1,3], index: 10, kind: input, shape index: {}]
  %s11 = inlined_call_operand.hbm [shape: f32[2,3], index: 11, kind: output, shape index: {}]
  %s12 = sld [smem:[#allocation0]]
  $region54: #{c3d_forward.7} parent=0
    _
  %s14 = ssub.s32 1, %s12
  %s15 = scalar_select 0, %s14, %s12
  $region1: #{c3d_forward.7} parent=0
    #allocation2 [shape = 'u8[1024]{0}', space=vmem, size = 0x400, scoped, tag = 'output window, operand 0, single buffered']
    #allocation3 [shape = 's32[1]{0}', space=sflag, size = 0x4, scoped, tag = 'scoped memory for c3d_forward.7']
    %16 = vsyncpa [#allocation3], 0
    // Predicated region
    $region2: #{c3d_forward.7} parent=1 // pred_check
      _
    $region3: #{c3d_forward.7} parent=1 // pred_check_branch
      %18 = sbr.rel (0) target = $region5
    $region4: #{c3d_forward.7} parent=1 // pred_region
      _
    $region5: #{c3d_forward.7} parent=1 // pred_fallthru
      _
    // Predicated region
    $region6: #{c3d_forward.7} parent=1 // pred_check
      _
    $region7: #{c3d_forward.7} parent=1 // pred_check_branch
      %20 = sbr.rel (0) target = $region9
    $region8: #{c3d_forward.7} parent=1 // pred_region
      _
    $region9: #{c3d_forward.7} parent=1 // pred_fallthru
      _
    // Predicated region
    $region10: #{c3d_forward.7} parent=1 // pred_check
      _
    $region11: #{c3d_forward.7} parent=1 // pred_check_branch
      %22 = sbr.rel (0) target = $region13
    $region12: #{c3d_forward.7} parent=1 // pred_region
      _
    $region13: #{c3d_forward.7} parent=1 // pred_fallthru
      _
    // Predicated region
    $region14: #{c3d_forward.7} parent=1 // pred_check
      _
    $region15: #{c3d_forward.7} parent=1 // pred_check_branch
      %24 = sbr.rel (0) target = $region17
    $region16: #{c3d_forward.7} parent=1 // pred_region
      _
    $region17: #{c3d_forward.7} parent=1 // pred_fallthru
      _
    // Predicated region
    $region18: #{c3d_forward.7} parent=1 // pred_check
      _
    $region19: #{c3d_forward.7} parent=1 // pred_check_branch
      %26 = sbr.rel (0) target = $region21
    $region20: #{c3d_forward.7} parent=1 // pred_region
      _
    $region21: #{c3d_forward.7} parent=1 // pred_fallthru
      _
    // Predicated region
    $region22: #{c3d_forward.7} parent=1 // pred_check
      _
    $region23: #{c3d_forward.7} parent=1 // pred_check_branch
      %28 = sbr.rel (0) target = $region25
    $region24: #{c3d_forward.7} parent=1 // pred_region
      _
    $region25: #{c3d_forward.7} parent=1 // pred_fallthru
      _
    // Predicated region
    $region26: #{c3d_forward.7} parent=1 // pred_check
      _
    $region27: #{c3d_forward.7} parent=1 // pred_check_branch
      %30 = sbr.rel (0) target = $region29
    $region28: #{c3d_forward.7} parent=1 // pred_region
      _
    $region29: #{c3d_forward.7} parent=1 // pred_fallthru
      _
    // Predicated region
    $region30: #{c3d_forward.7} parent=1 // pred_check
      _
    $region31: #{c3d_forward.7} parent=1 // pred_check_branch
      %32 = sbr.rel (0) target = $region33
    $region32: #{c3d_forward.7} parent=1 // pred_region
      _
    $region33: #{c3d_forward.7} parent=1 // pred_fallthru
      _
    // Predicated region
    $region34: #{c3d_forward.7} parent=1 // pred_check
      _
    $region35: #{c3d_forward.7} parent=1 // pred_check_branch
      %34 = sbr.rel (0) target = $region37
    $region36: #{c3d_forward.7} parent=1 // pred_region
      _
    $region37: #{c3d_forward.7} parent=1 // pred_fallthru
      _
    // Predicated region
    $region38: #{c3d_forward.7} parent=1 // pred_check
      _
    $region39: #{c3d_forward.7} parent=1 // pred_check_branch
      %36 = sbr.rel (0) target = $region41
    $region40: #{c3d_forward.7} parent=1 // pred_region
      _
    $region41: #{c3d_forward.7} parent=1 // pred_fallthru
      _
    // Predicated region
    $region42: #{c3d_forward.7} parent=1 // pred_check
      _
    $region43: #{c3d_forward.7} parent=1 // pred_check_branch
      %38 = sbr.rel (0) target = $region45
    $region44: #{c3d_forward.7} parent=1 // pred_region
      _
    $region45: #{c3d_forward.7} parent=1 // pred_fallthru
      _
    %v40 = vld [vmem:[%s0] sm:$0x7f]
    %v41 = vld [vmem:[%s2] sm:$0xf]
    %v42 = vld [vmem:[%s2 + $0x4] sm:$0xf]
    %v43 = vld [vmem:[%s2 + $0x8] sm:$0xf]
    %v44 = vld [vmem:[%s2 + $0xc] sm:$0xf]
    %v45 = vld [vmem:[%s2 + $0x10] sm:$0xf]
    %v46 = vld [vmem:[%s2 + $0x14] sm:$0xf]
    %v47 = vld [vmem:[%s2 + $0x18] sm:$0xf]
    %v48 = vld [vmem:[%s2 + $0x1c] sm:$0xf]
    %v49 = vld [vmem:[%s2 + $0x20] sm:$0xf]
    %v50 = vld [vmem:[%s2 + $0x24] sm:$0xf]
    %v51 = vld [vmem:[%s2 + $0x28] sm:$0xf]
    %v52 = vld [vmem:[%s2 + $0x2c] sm:$0xf]
    %v53 = vld [vmem:[%s2 + $0x30] sm:$0xf]
    %v54 = vld [vmem:[%s2 + $0x34] sm:$0xf]
    %v55 = vld [vmem:[%s2 + $0x38] sm:$0xf]
    %v56 = vld [vmem:[%s2 + $0x3c] sm:$0xf]
    %v57 = vld [vmem:[%s2 + $0x40] sm:$0xf]
    %v58 = vld [vmem:[%s2 + $0x44] sm:$0xf]
    %v59 = vld [vmem:[%s2 + $0x48] sm:$0xf]
    %v60 = vld [vmem:[%s2 + $0x4c] sm:$0xf]
    %v61 = vld [vmem:[%s2 + $0x50] sm:$0xf]
    %v62 = vld [vmem:[%s2 + $0x54] sm:$0xf]
    %v63 = vld [vmem:[%s2 + $0x58] sm:$0xf]
    %v64 = vld [vmem:[%s2 + $0x5c] sm:$0xf]
    %v65 = vld [vmem:[%s2 + $0x60] sm:$0xf]
    %v66 = vld [vmem:[%s2 + $0x64] sm:$0xf]
    %v67 = vld [vmem:[%s2 + $0x68] sm:$0xf]
    %v68 = vld [vmem:[%s2 + $0x6c] sm:$0xf]
    %v69 = vld [vmem:[%s2 + $0x70] sm:$0xf]
    %v70 = vld [vmem:[%s2 + $0x74] sm:$0xf]
    %v71 = vld [vmem:[%s2 + $0x78] sm:$0xf]
    %v72 = vld [vmem:[%s2 + $0x7c] sm:$0xf]
    %v73 = vld [vmem:[%s2 + $0x80] sm:$0xf]
    %v74 = vld [vmem:[%s2 + $0x84] sm:$0xf]
    %v75 = vld [vmem:[%s2 + $0x88] sm:$0xf]
    %v76 = vld [vmem:[%s2 + $0x8c] sm:$0xf]
    %v77 = vld [vmem:[%s2 + $0x90] sm:$0xf]
    %v78 = vld [vmem:[%s2 + $0x94] sm:$0xf]
    %v79 = vld [vmem:[%s2 + $0x98] sm:$0xf]
    %v80 = vld [vmem:[%s2 + $0x9c] sm:$0xf]
    %v81 = vld [vmem:[%s2 + $0xa0] sm:$0xf]
    %v82 = vld [vmem:[%s2 + $0xa4] sm:$0xf]
    %v83 = vld [vmem:[%s2 + $0xa8] sm:$0xf]
    %v84 = vld [vmem:[%s2 + $0xac] sm:$0xf]
    %v85 = vld [vmem:[%s2 + $0xb0] sm:$0xf]
    %v86 = vld [vmem:[%s2 + $0xb4] sm:$0xf]
    %v87 = vld [vmem:[%s2 + $0xb8] sm:$0xf]
    %v88 = vld [vmem:[%s2 + $0xbc] sm:$0xf]
    %v89 = vld [vmem:[%s2 + $0xc0] sm:$0xf]
    %v90 = vld [vmem:[%s2 + $0xc4] sm:$0xf]
    %v91 = vld [vmem:[%s2 + $0xc8] sm:$0xf]
    %v92 = vld [vmem:[%s2 + $0xcc] sm:$0xf]
    %v93 = vld [vmem:[%s2 + $0xd0] sm:$0xf]
    %v94 = vld [vmem:[%s2 + $0xd4] sm:$0xf]
    %v95 = vld [vmem:[%s2 + $0xd8] sm:$0xf]
    %v96 = vld [vmem:[%s2 + $0xdc] sm:$0xf]
    %v97 = vld [vmem:[%s2 + $0xe0] sm:$0xf]
    %v98 = vld [vmem:[%s2 + $0xe4] sm:$0xf]
    %v99 = vld [vmem:[%s2 + $0xe8] sm:$0xf]
    %v100 = vld [vmem:[%s2 + $0xec] sm:$0xf]
    %v101 = vld [vmem:[%s2 + $0xf0] sm:$0xf]
    %v102 = vld [vmem:[%s2 + $0xf4] sm:$0xf]
    %v103 = vld [vmem:[%s2 + $0xf8] sm:$0xf]
    %v104 = vld [vmem:[%s2 + $0xfc] sm:$0xf]
    %v105 = vld [vmem:[%s2 + $0x100] sm:$0xf]
    %v106 = vld [vmem:[%s2 + $0x104] sm:$0xf]
    %v107 = vld [vmem:[%s2 + $0x108] sm:$0xf]
    %v108 = vld [vmem:[%s2 + $0x10c] sm:$0xf]
    %v109 = vld [vmem:[%s2 + $0x110] sm:$0xf]
    %v110 = vld [vmem:[%s2 + $0x114] sm:$0xf]
    %v111 = vld [vmem:[%s2 + $0x118] sm:$0xf]
    %v112 = vld [vmem:[%s2 + $0x11c] sm:$0xf]
    %v113 = vld [vmem:[%s2 + $0x120] sm:$0xf]
    %v114 = vld [vmem:[%s2 + $0x124] sm:$0xf]
    %v115 = vld [vmem:[%s2 + $0x128] sm:$0xf]
    %v116 = vld [vmem:[%s2 + $0x12c] sm:$0xf]
    %v117 = vld [vmem:[%s2 + $0x130] sm:$0xf]
    %v118 = vld [vmem:[%s2 + $0x134] sm:$0xf]
    %v119 = vld [vmem:[%s2 + $0x138] sm:$0xf]
    %v120 = vld [vmem:[%s2 + $0x13c] sm:$0xf]
    %v121 = vld [vmem:[%s2 + $0x140] sm:$0xf]
    %v122 = vld [vmem:[%s2 + $0x144] sm:$0xf]
    %v123 = vld [vmem:[%s2 + $0x148] sm:$0xf]
    %v124 = vld [vmem:[%s2 + $0x14c] sm:$0xf]
    %v125 = vld [vmem:[%s2 + $0x150] sm:$0xf]
    %v126 = vld [vmem:[%s2 + $0x154] sm:$0xf]
    %v127 = vld [vmem:[%s2 + $0x158] sm:$0xf]
    %v128 = vld [vmem:[%s2 + $0x15c] sm:$0xf]
    %v129 = vld [vmem:[%s2 + $0x160] sm:$0xf]
    %v130 = vld [vmem:[%s2 + $0x164] sm:$0xf]
    %v131 = vld [vmem:[%s2 + $0x168] sm:$0xf]
    %v132 = vld [vmem:[%s2 + $0x16c] sm:$0xf]
    %v133 = vld [vmem:[%s2 + $0x170] sm:$0xf]
    %v134 = vld [vmem:[%s2 + $0x174] sm:$0xf]
    %v135 = vld [vmem:[%s2 + $0x178] sm:$0xf]
    %v136 = vld [vmem:[%s2 + $0x17c] sm:$0xf]
    %v137 = vld [vmem:[%s2 + $0x180] sm:$0xf]
    %v138 = vld [vmem:[%s2 + $0x184] sm:$0xf]
    %v139 = vld [vmem:[%s2 + $0x188] sm:$0xf]
    %v140 = vld [vmem:[%s2 + $0x18c] sm:$0xf]
    %v141 = vld [vmem:[%s2 + $0x190] sm:$0xf]
    %v142 = vld [vmem:[%s2 + $0x194] sm:$0xf]
    %v143 = vld [vmem:[%s2 + $0x198] sm:$0xf]
    %v144 = vld [vmem:[%s2 + $0x19c] sm:$0xf]
    %v145 = vld [vmem:[%s2 + $0x1a0] sm:$0xf]
    %v146 = vld [vmem:[%s2 + $0x1a4] sm:$0xf]
    %v147 = vld [vmem:[%s2 + $0x1a8] sm:$0xf]
    %v148 = vld [vmem:[%s2 + $0x1ac] sm:$0xf]
    %v149 = vld [vmem:[%s3] sm:$0x1]
    %v151 = vperm.slane %v149, 0
    %154 = vst [vmem:[#allocation1] ss:$9 sm:$0xff] %v40
    %v155 = vld [vmem:[#allocation1] sm:$0xff]
    %v156 = vld [vmem:[#allocation1 + $0x9] sm:$0xff]
    %v157 = vld [vmem:[#allocation1 + $0x12] sm:$0xff]
    %v158 = vld [vmem:[#allocation1 + $0x1b] sm:$0xff]
    %v159 = vld [vmem:[#allocation1 + $0x24] sm:$0xff]
    %v160 = vld [vmem:[#allocation1 + $0x2d] sm:$0xff]
    %v161 = vld [vmem:[#allocation1 + $0x36] sm:$0xff]
    %v276 = vunpack.c.l.b16 %v41
    %v277 = vunpack.c.l.b16 %v42
    %v278 = vunpack.c.l.b16 %v43
    %v279 = vunpack.c.l.b16 %v44
    %v280 = vunpack.c.l.b16 %v45
    %v281 = vunpack.c.l.b16 %v46
    %v282 = vunpack.c.l.b16 %v47
    %v283 = vunpack.c.l.b16 %v48
    %v284 = vunpack.c.l.b16 %v49
    %v285 = vunpack.c.l.b16 %v50
    %v286 = vunpack.c.l.b16 %v51
    %v287 = vunpack.c.l.b16 %v52
    %v288 = vunpack.c.l.b16 %v53
    %v289 = vunpack.c.l.b16 %v54
    %v290 = vunpack.c.l.b16 %v55
    %v291 = vunpack.c.l.b16 %v56
    %v292 = vunpack.c.l.b16 %v57
    %v293 = vunpack.c.l.b16 %v58
    %v294 = vunpack.c.l.b16 %v59
    %v295 = vunpack.c.l.b16 %v60
    %v296 = vunpack.c.l.b16 %v61
    %v297 = vunpack.c.l.b16 %v62
    %v298 = vunpack.c.l.b16 %v63
    %v299 = vunpack.c.l.b16 %v64
    %v300 = vunpack.c.l.b16 %v65
    %v301 = vunpack.c.l.b16 %v66
    %v302 = vunpack.c.l.b16 %v67
    %v303 = vunpack.c.l.b16 %v68
    %v304 = vunpack.c.l.b16 %v69
    %v305 = vunpack.c.l.b16 %v70
    %v306 = vunpack.c.l.b16 %v71
    %v307 = vunpack.c.l.b16 %v72
    %v308 = vunpack.c.l.b16 %v73
    %v309 = vunpack.c.l.b16 %v74
    %v310 = vunpack.c.l.b16 %v75
    %v311 = vunpack.c.l.b16 %v76
    %v312 = vunpack.c.l.b16 %v77
    %v313 = vunpack.c.l.b16 %v78
    %v314 = vunpack.c.l.b16 %v79
    %v315 = vunpack.c.l.b16 %v80
    %v316 = vunpack.c.l.b16 %v81
    %v317 = vunpack.c.l.b16 %v82
    %v318 = vunpack.c.l.b16 %v83
    %v319 = vunpack.c.l.b16 %v84
    %v320 = vunpack.c.l.b16 %v85
    %v321 = vunpack.c.l.b16 %v86
    %v322 = vunpack.c.l.b16 %v87
    %v323 = vunpack.c.l.b16 %v88
    %v324 = vunpack.c.l.b16 %v89
    %v325 = vunpack.c.l.b16 %v90
    %v326 = vunpack.c.l.b16 %v91
    %v327 = vunpack.c.l.b16 %v92
    %v328 = vunpack.c.l.b16 %v93
    %v329 = vunpack.c.l.b16 %v94
    %v330 = vunpack.c.l.b16 %v95
    %v331 = vunpack.c.l.b16 %v96
    %v332 = vunpack.c.l.b16 %v97
    %v333 = vunpack.c.l.b16 %v98
    %v334 = vunpack.c.l.b16 %v99
    %v335 = vunpack.c.l.b16 %v100
    %v336 = vunpack.c.l.b16 %v101
    %v337 = vunpack.c.l.b16 %v102
    %v338 = vunpack.c.l.b16 %v103
    %v339 = vunpack.c.l.b16 %v104
    %v340 = vunpack.c.l.b16 %v105
    %v341 = vunpack.c.l.b16 %v106
    %v342 = vunpack.c.l.b16 %v107
    %v343 = vunpack.c.l.b16 %v108
    %v344 = vunpack.c.l.b16 %v109
    %v345 = vunpack.c.l.b16 %v110
    %v346 = vunpack.c.l.b16 %v111
    %v347 = vunpack.c.l.b16 %v112
    %v348 = vunpack.c.l.b16 %v113
    %v349 = vunpack.c.l.b16 %v114
    %v350 = vunpack.c.l.b16 %v115
    %v351 = vunpack.c.l.b16 %v116
    %v352 = vunpack.c.l.b16 %v117
    %v353 = vunpack.c.l.b16 %v118
    %v354 = vunpack.c.l.b16 %v119
    %v355 = vunpack.c.l.b16 %v120
    %v356 = vunpack.c.l.b16 %v121
    %v357 = vunpack.c.l.b16 %v122
    %v358 = vunpack.c.l.b16 %v123
    %v359 = vunpack.c.l.b16 %v124
    %v360 = vunpack.c.l.b16 %v125
    %v361 = vunpack.c.l.b16 %v126
    %v362 = vunpack.c.l.b16 %v127
    %v363 = vunpack.c.l.b16 %v128
    %v364 = vunpack.c.l.b16 %v129
    %v365 = vunpack.c.l.b16 %v130
    %v366 = vunpack.c.l.b16 %v131
    %v367 = vunpack.c.l.b16 %v132
    %v368 = vunpack.c.l.b16 %v133
    %v369 = vunpack.c.l.b16 %v134
    %v370 = vunpack.c.l.b16 %v135
    %v371 = vunpack.c.l.b16 %v136
    %v372 = vunpack.c.l.b16 %v137
    %v373 = vunpack.c.l.b16 %v138
    %v374 = vunpack.c.l.b16 %v139
    %v375 = vunpack.c.l.b16 %v140
    %v376 = vunpack.c.l.b16 %v141
    %v377 = vunpack.c.l.b16 %v142
    %v378 = vunpack.c.l.b16 %v143
    %v379 = vunpack.c.l.b16 %v144
    %v380 = vunpack.c.l.b16 %v145
    %v381 = vunpack.c.l.b16 %v146
    %v382 = vunpack.c.l.b16 %v147
    %v383 = vunpack.c.l.b16 %v148
    %v384 = vpack.c.b16 %v277, %v276
    %v385 = vpack.c.b16 %v279, %v278
    %v386 = vpack.c.b16 %v281, %v280
    %v387 = vpack.c.b16 %v283, %v282
    %v388 = vpack.c.b16 %v285, %v284
    %v389 = vpack.c.b16 %v287, %v286
    %v390 = vpack.c.b16 %v289, %v288
    %v391 = vpack.c.b16 %v291, %v290
    %v392 = vpack.c.b16 %v293, %v292
    %v393 = vpack.c.b16 %v295, %v294
    %v394 = vpack.c.b16 %v297, %v296
    %v395 = vpack.c.b16 %v299, %v298
    %v396 = vpack.c.b16 %v301, %v300
    %v397 = vpack.c.b16 %v303, %v302
    %v398 = vpack.c.b16 %v305, %v304
    %v399 = vpack.c.b16 %v307, %v306
    %v400 = vpack.c.b16 %v309, %v308
    %v401 = vpack.c.b16 %v311, %v310
    %v402 = vpack.c.b16 %v313, %v312
    %v403 = vpack.c.b16 %v315, %v314
    %v404 = vpack.c.b16 %v317, %v316
    %v405 = vpack.c.b16 %v319, %v318
    %v406 = vpack.c.b16 %v321, %v320
    %v407 = vpack.c.b16 %v323, %v322
    %v408 = vpack.c.b16 %v325, %v324
    %v409 = vpack.c.b16 %v327, %v326
    %v410 = vpack.c.b16 %v329, %v328
    %v411 = vpack.c.b16 %v331, %v330
    %v412 = vpack.c.b16 %v333, %v332
    %v413 = vpack.c.b16 %v335, %v334
    %v414 = vpack.c.b16 %v337, %v336
    %v415 = vpack.c.b16 %v339, %v338
    %v416 = vpack.c.b16 %v341, %v340
    %v417 = vpack.c.b16 %v343, %v342
    %v418 = vpack.c.b16 %v345, %v344
    %v419 = vpack.c.b16 %v347, %v346
    %v420 = vpack.c.b16 %v349, %v348
    %v421 = vpack.c.b16 %v351, %v350
    %v422 = vpack.c.b16 %v353, %v352
    %v423 = vpack.c.b16 %v355, %v354
    %v424 = vpack.c.b16 %v357, %v356
    %v425 = vpack.c.b16 %v359, %v358
    %v426 = vpack.c.b16 %v361, %v360
    %v427 = vpack.c.b16 %v363, %v362
    %v428 = vpack.c.b16 %v365, %v364
    %v429 = vpack.c.b16 %v367, %v366
    %v430 = vpack.c.b16 %v369, %v368
    %v431 = vpack.c.b16 %v371, %v370
    %v432 = vpack.c.b16 %v373, %v372
    %v433 = vpack.c.b16 %v375, %v374
    %v434 = vpack.c.b16 %v377, %v376
    %v435 = vpack.c.b16 %v379, %v378
    %v436 = vpack.c.b16 %v381, %v380
    %v437 = vpack.c.b16 %v383, %v382
    %vm492 = vcmask 785408
    %v493 = vsel %vm492, %v161, 0
    %495 = vmatpush.bf16.msra.mxu0 %v391
    %496 = vmatpush.bf16.msra.mxu0 %v390
    %497 = vmatpush.bf16.msra.mxu0 %v389
    %498 = vmatpush.bf16.msra.mxu0 %v388
    %499 = vmatpush.bf16.msra.mxu0 %v387
    %500 = vmatpush.bf16.msra.mxu0 %v386
    %501 = vmatpush.bf16.msra.mxu0 %v385
    %502 = vmatpush.bf16.msra.mxu0 %v384
    %503 = vmatmul.bf16.gmra.mxu0 %v155
    %v504 = vpop.f32.mrf.mxu0
    %v505 = vadd.f32 %v151, %v504
    %v506 = vpop.f32.mrf.mxu0
    %507 = vdwg.mxu0
    %508 = vmatpush.bf16.msra.mxu0 %v399
    %509 = vmatpush.bf16.msra.mxu0 %v398
    %510 = vmatpush.bf16.msra.mxu0 %v397
    %511 = vmatpush.bf16.msra.mxu0 %v396
    %512 = vmatpush.bf16.msra.mxu0 %v395
    %513 = vmatpush.bf16.msra.mxu0 %v394
    %514 = vmatpush.bf16.msra.mxu0 %v393
    %515 = vmatpush.bf16.msra.mxu0 %v392
    %516 = vmatmul.bf16.gmra.mxu0 %v156
    %v517 = vpop.f32.mrf.mxu0
    %v518 = vadd.f32 %v505, %v517
    %v519 = vpop.f32.mrf.mxu0
    %520 = vdwg.mxu0
    %521 = vmatpush.bf16.msra.mxu0 %v407
    %522 = vmatpush.bf16.msra.mxu0 %v406
    %523 = vmatpush.bf16.msra.mxu0 %v405
    %524 = vmatpush.bf16.msra.mxu0 %v404
    %525 = vmatpush.bf16.msra.mxu0 %v403
    %526 = vmatpush.bf16.msra.mxu0 %v402
    %527 = vmatpush.bf16.msra.mxu0 %v401
    %528 = vmatpush.bf16.msra.mxu0 %v400
    %529 = vmatmul.bf16.gmra.mxu0 %v157
    %v530 = vpop.f32.mrf.mxu0
    %v531 = vadd.f32 %v518, %v530
    %v532 = vpop.f32.mrf.mxu0
    %533 = vdwg.mxu0
    %534 = vmatpush.bf16.msra.mxu0 %v415
    %535 = vmatpush.bf16.msra.mxu0 %v414
    %536 = vmatpush.bf16.msra.mxu0 %v413
    %537 = vmatpush.bf16.msra.mxu0 %v412
    %538 = vmatpush.bf16.msra.mxu0 %v411
    %539 = vmatpush.bf16.msra.mxu0 %v410
    %540 = vmatpush.bf16.msra.mxu0 %v409
    %541 = vmatpush.bf16.msra.mxu0 %v408
    %542 = vmatmul.bf16.gmra.mxu0 %v158
    %v543 = vpop.f32.mrf.mxu0
    %v544 = vadd.f32 %v531, %v543
    %v545 = vpop.f32.mrf.mxu0
    %546 = vdwg.mxu0
    %547 = vmatpush.bf16.msra.mxu0 %v423
    %548 = vmatpush.bf16.msra.mxu0 %v422
    %549 = vmatpush.bf16.msra.mxu0 %v421
    %550 = vmatpush.bf16.msra.mxu0 %v420
    %551 = vmatpush.bf16.msra.mxu0 %v419
    %552 = vmatpush.bf16.msra.mxu0 %v418
    %553 = vmatpush.bf16.msra.mxu0 %v417
    %554 = vmatpush.bf16.msra.mxu0 %v416
    %555 = vmatmul.bf16.gmra.mxu0 %v159
    %v556 = vpop.f32.mrf.mxu0
    %v557 = vadd.f32 %v544, %v556
    %v558 = vpop.f32.mrf.mxu0
    %559 = vdwg.mxu0
    %560 = vmatpush.bf16.msra.mxu0 %v431
    %561 = vmatpush.bf16.msra.mxu0 %v430
    %562 = vmatpush.bf16.msra.mxu0 %v429
    %563 = vmatpush.bf16.msra.mxu0 %v428
    %564 = vmatpush.bf16.msra.mxu0 %v427
    %565 = vmatpush.bf16.msra.mxu0 %v426
    %566 = vmatpush.bf16.msra.mxu0 %v425
    %567 = vmatpush.bf16.msra.mxu0 %v424
    %568 = vmatmul.bf16.gmra.mxu0 %v160
    %v569 = vpop.f32.mrf.mxu0
    %v570 = vadd.f32 %v557, %v569
    %v571 = vpop.f32.mrf.mxu0
    %572 = vdwg.mxu0
    %573 = vmatpush.bf16.msra.mxu0 0
    %574 = vmatpush.bf16.msra.mxu0 0
    %575 = vmatpush.bf16.msra.mxu0 %v437
    %576 = vmatpush.bf16.msra.mxu0 %v436
    %577 = vmatpush.bf16.msra.mxu0 %v435
    %578 = vmatpush.bf16.msra.mxu0 %v434
    %579 = vmatpush.bf16.msra.mxu0 %v433
    %580 = vmatpush.bf16.msra.mxu0 %v432
    %581 = vmatmul.bf16.gmra.mxu0 %v493
    %v582 = vpop.f32.mrf.mxu0
    %v583 = vadd.f32 %v570, %v582
    %v584 = vpop.f32.mrf.mxu0
    %585 = vdwg.mxu0
    %v586 = vmax.f32 %v583, 0.0
    %v587 = vld [vmem:[%s1] sm:$0x1]
    %v588 = vld [vmem:[%s4] sm:$0xf]
    %v589 = vld [vmem:[%s4 + $0x4] sm:$0xf]
    %v590 = vld [vmem:[%s4 + $0x8] sm:$0xf]
    %v591 = vld [vmem:[%s4 + $0xc] sm:$0xf]
    %v592 = vld [vmem:[%s4 + $0x10] sm:$0xf]
    %v593 = vld [vmem:[%s4 + $0x14] sm:$0xf]
    %v594 = vld [vmem:[%s4 + $0x18] sm:$0xf]
    %v595 = vld [vmem:[%s4 + $0x1c] sm:$0xf]
    %v596 = vld [vmem:[%s4 + $0x20] sm:$0xf]
    %v597 = vld [vmem:[%s4 + $0x24] sm:$0xf]
    %v598 = vld [vmem:[%s4 + $0x28] sm:$0xf]
    %v599 = vld [vmem:[%s4 + $0x2c] sm:$0xf]
    %v600 = vld [vmem:[%s5] sm:$0x1]
    %v602 = vperm.slane %v600, 0
    %v616 = vunpack.c.l.b16 %v588
    %v617 = vunpack.c.l.b16 %v589
    %v618 = vunpack.c.l.b16 %v590
    %v619 = vunpack.c.l.b16 %v591
    %v620 = vunpack.c.l.b16 %v592
    %v621 = vunpack.c.l.b16 %v593
    %v622 = vunpack.c.l.b16 %v594
    %v623 = vunpack.c.l.b16 %v595
    %v624 = vunpack.c.l.b16 %v596
    %v625 = vunpack.c.l.b16 %v597
    %v626 = vunpack.c.l.b16 %v598
    %v627 = vunpack.c.l.b16 %v599
    %v628 = vpack.c.b16 %v617, %v616
    %v629 = vpack.c.b16 %v619, %v618
    %v630 = vpack.c.b16 %v621, %v620
    %v631 = vpack.c.b16 %v623, %v622
    %v632 = vpack.c.b16 %v625, %v624
    %v633 = vpack.c.b16 %v627, %v626
    %v641 = vsel %vm492, %v587, 0
    %643 = vmatpush.bf16.msra.mxu0 0
    %644 = vmatpush.bf16.msra.mxu0 0
    %645 = vmatpush.bf16.msra.mxu0 %v633
    %646 = vmatpush.bf16.msra.mxu0 %v632
    %647 = vmatpush.bf16.msra.mxu0 %v631
    %648 = vmatpush.bf16.msra.mxu0 %v630
    %649 = vmatpush.bf16.msra.mxu0 %v629
    %650 = vmatpush.bf16.msra.mxu0 %v628
    %651 = vmatmul.bf16.gmra.mxu0 %v641
    %v652 = vpop.f32.mrf.mxu0
    %v653 = vadd.f32 %v602, %v652
    %v654 = vpop.f32.mrf.mxu0
    %655 = vdwg.mxu0
    %v656 = vmax.f32 %v653, 0.0
    %v657 = vpack.c.bf16 %v586, %v586
    %v658 = vld [vmem:[%s6] sm:$0xf]
    %v659 = vld [vmem:[%s6 + $0x4] sm:$0xf]
    %v660 = vld [vmem:[%s6 + $0x8] sm:$0xf]
    %v661 = vld [vmem:[%s6 + $0xc] sm:$0xf]
    %v662 = vpack.c.bf16 %v656, %v656
    %v663 = vld [vmem:[%s7] sm:$0xf]
    %v664 = vld [vmem:[%s7 + $0x4] sm:$0xf]
    %v667 = vunpack.c.l.b16 %v663
    %v668 = vunpack.c.l.b16 %v664
    %v669 = vpack.c.b16 %v668, %v667
    %vm671 = vcmask 130048
    %v673 = vsel %vm671, %v662, 0
    %675 = vmatpush.bf16.msra.mxu0 0
    %676 = vmatpush.bf16.msra.mxu0 0
    %677 = vmatpush.bf16.msra.mxu0 0
    %678 = vmatpush.bf16.msra.mxu0 0
    %679 = vmatpush.bf16.msra.mxu0 0
    %680 = vmatpush.bf16.msra.mxu0 0
    %681 = vmatpush.bf16.msra.mxu0 0
    %682 = vmatpush.bf16.msra.mxu0 %v669
    %683 = vmatmul.bf16.gmra.mxu0 %v673
    %v684 = vpop.f32.mrf.mxu0
    %v685 = vadd.f32 0.0, %v684
    %v686 = vpop.f32.mrf.mxu0
    %687 = vdwg.mxu0
    %v692 = vunpack.c.l.b16 %v658
    %v693 = vunpack.c.l.b16 %v659
    %v694 = vunpack.c.l.b16 %v660
    %v695 = vunpack.c.l.b16 %v661
    %v696 = vpack.c.b16 %v693, %v692
    %v697 = vpack.c.b16 %v695, %v694
    %vm700 = vcmask 261120
    %v702 = vsel %vm700, %v657, 0
    %704 = vmatpush.bf16.msra.mxu0 0
    %705 = vmatpush.bf16.msra.mxu0 0
    %706 = vmatpush.bf16.msra.mxu0 0
    %707 = vmatpush.bf16.msra.mxu0 0
    %708 = vmatpush.bf16.msra.mxu0 0
    %709 = vmatpush.bf16.msra.mxu0 0
    %710 = vmatpush.bf16.msra.mxu0 %v697
    %711 = vmatpush.bf16.msra.mxu0 %v696
    %712 = vmatmul.bf16.gmra.mxu0 %v702
    %v713 = vpop.f32.mrf.mxu0
    %v714 = vadd.f32 %v685, %v713
    %v715 = vpop.f32.mrf.mxu0
    %716 = vdwg.mxu0
    %v717 = vld [vmem:[%s8] sm:$0x1]
    %v719 = vperm.slane %v717, 0
    %v721 = vadd.f32 %v714, %v719
    %v722 = vmax.f32 %v721, 0.0
    %v723 = vpack.c.bf16 %v722, %v722
    %v724 = vld [vmem:[%s9] sm:$0xf]
    %v725 = vld [vmem:[%s9 + $0x4] sm:$0xf]
    %v726 = vld [vmem:[%s9 + $0x8] sm:$0xf]
    %v727 = vld [vmem:[%s9 + $0xc] sm:$0xf]
    %v728 = vld [vmem:[%s10] sm:$0x1]
    %v730 = vperm.slane %v728, 0
    %v736 = vunpack.c.l.b16 %v724
    %v737 = vunpack.c.l.b16 %v725
    %v738 = vunpack.c.l.b16 %v726
    %v739 = vunpack.c.l.b16 %v727
    %v740 = vpack.c.b16 %v737, %v736
    %v741 = vpack.c.b16 %v739, %v738
    %v745 = vsel %vm700, %v723, 0
    %747 = vmatpush.bf16.msra.mxu0 0
    %748 = vmatpush.bf16.msra.mxu0 0
    %749 = vmatpush.bf16.msra.mxu0 0
    %750 = vmatpush.bf16.msra.mxu0 0
    %751 = vmatpush.bf16.msra.mxu0 0
    %752 = vmatpush.bf16.msra.mxu0 0
    %753 = vmatpush.bf16.msra.mxu0 %v741
    %754 = vmatpush.bf16.msra.mxu0 %v740
    %755 = vmatmul.bf16.gmra.mxu0 %v745
    %v756 = vpop.f32.mrf.mxu0
    %v757 = vadd.f32 %v730, %v756
    %v758 = vpop.f32.mrf.mxu0
    %759 = vdwg.mxu0
    %vm760 = vcmask 17408
    %761 = vst.msk [vmem:[#allocation2] sm:$0x3] %vm760, %v757
    // Predicated region
    $region46: #{c3d_forward.7} parent=1 // pred_check
      _
    $region47: #{c3d_forward.7} parent=1 // pred_check_branch
      %763 = sbr.rel (0) target = $region49
    $region48: #{c3d_forward.7} parent=1 // pred_region
      %765 = vsyncadd [#allocation3], 0
      %s767 = sshll.u32 [#allocation2], 4
      %s768 = int_to_ptr.vmem [resolvable:$true] %s767
      %s769 = sshll.u32 %s11, 4
      %s770 = int_to_ptr.hbm [resolvable:$true] %s769
      %772 = dma.vmem_to_hbm [thread:$0]  %s768, 32, %s770, [#allocation3]
    $region49: #{c3d_forward.7} parent=1 // pred_fallthru
      _
    // Predicated region
    $region50: #{c3d_forward.7} parent=1 // pred_check
      _
    $region51: #{c3d_forward.7} parent=1 // pred_check_branch
      %774 = sbr.rel (0) target = $region53
    $region52: #{c3d_forward.7} parent=1 // pred_region
      %776 = dma.done [#allocation3], 32
    $region53: #{c3d_forward.7} parent=1 // pred_fallthru
      _
    %777 = vsyncpa [#allocation3], 1

</llo_original>
